<compile_context>
chip_gen: v7x
topology: tpu7x:2x2x1
jax: 0.10.0
libtpu: 0.0.40
codegen_flags: <defaults>
</compile_context>

<pallas_src>
import functools
import numpy as np
import jax
import jax.numpy as jnp
from jax.experimental import pallas as pl
from jax.experimental.pallas import tpu as pltpu


_NEG_BIG = -1e30  # finite "-inf" for masked softmax rows (avoids inf-inf NaNs)


def _pure_mhim_kernel(x_ref, w_emb_ref, b_emb_ref, wab_ref, wc_ref, wp_ref,
                      bp_ref, out_ref, m_ref, l_ref, acc_ref,
                      *, attn_d, tile_n, n_valid, need_mask):
    ni = pl.program_id(1)

    # ---- init running-softmax state at the first N-tile of each bag --------
    @pl.when(ni == 0)
    def _():
        m_ref[...] = jnp.full_like(m_ref, _NEG_BIG)
        l_ref[...] = jnp.zeros_like(l_ref)
        acc_ref[...] = jnp.zeros_like(acc_ref)

    # x arrives in its stored dtype; cast to bf16 at the MXU boundary only
    # (no separate full-HBM cast/pad pass in the wrapper).
    x = x_ref[0].astype(jnp.bfloat16)                              # [TN, Din]

    # patch_to_emb: Linear + ReLU (bf16 operands, f32 accumulation on the MXU)
    h = jnp.dot(x, w_emb_ref[...], preferred_element_type=jnp.float32)
    h = jnp.maximum(h + b_emb_ref[...], 0.0)                       # [TN, M] f32

    if need_mask:
        # Ragged last tile handled in-kernel: rows DMA'd from past the end of
        # the bag are garbage -> zero them at h (NaN-safe; 0 * NaN would poison
        # the accumulator otherwise) and push their scores to -inf below.
        row = jax.lax.broadcasted_iota(jnp.int32, (tile_n, 1), 0) + ni * tile_n
        valid = row < n_valid
        h = jnp.where(valid, h, 0.0)

    # fused gated attention: one [M, 2D] matmul fills the 256-wide MXU
    ab = jnp.dot(h.astype(wab_ref.dtype), wab_ref[...],
                 preferred_element_type=jnp.float32)               # [TN, 2D] f32
    a = jnp.maximum(ab[:, :attn_d], 0.0)
    b = jax.nn.sigmoid(ab[:, attn_d:])
    gated = a * b                                                  # [TN, D] f32

    # attention_c ([D] -> 1) as a VPU row-reduction instead of a 1-column matmul
    scores = jnp.sum(gated * wc_ref[...], axis=-1, keepdims=True)  # [TN, 1] f32

    if need_mask:
        scores = jnp.where(valid, scores, _NEG_BIG)

    # ---- online softmax update (running max / sum / weighted-h accumulator) -
    m_prev = m_ref[...]                                            # [1, 1]
    m_new = jnp.maximum(m_prev, jnp.max(scores, axis=0, keepdims=True))
    alpha = jnp.exp(m_prev - m_new)                                # [1, 1]
    p = jnp.exp(scores - m_new)                                    # [TN, 1]
    l_ref[...] = alpha * l_ref[...] + jnp.sum(p, axis=0, keepdims=True)
    acc_ref[...] = alpha * acc_ref[...] + jnp.sum(p * h, axis=0, keepdims=True)
    m_ref[...] = m_new

    # ---- finalize on the last N-tile: normalize + predictor ----------------
    @pl.when(ni == pl.num_programs(1) - 1)
    def _():
        pooled = acc_ref[...] / l_ref[...]                         # [1, M] f32
        logits = jnp.dot(pooled, wp_ref[...],
                         preferred_element_type=jnp.float32) + bp_ref[...]
        out_ref[0] = logits.astype(out_ref.dtype)


def _round_up(v, m):
    return ((v + m - 1) // m) * m


def _choose_tile(n, requested):
    """Tile rows: single tile for tiny bags, 256-multiples when streaming."""
    requested = max(16, int(requested))
    if requested >= n:
        return _round_up(max(n, 1), 16)         # whole bag in one tile
    if requested >= 256:
        return _round_up(requested, 256)
    return _round_up(requested, 16)


def _derived_vmem_limit(tn, din, m, d, c, x_itemsize, x_bufs, w_bufs):
    """Size-derived VMEM budget, capped by the detected per-gen capacity."""
    x_bytes = tn * din * x_itemsize * x_bufs
    w_bytes = w_bufs * (din * m * 2 + m * 2 * d * 2
                        + (m + d + m * c + c) * 4)
    scratch_bytes = (2 + m) * 4
    # f32 intermediates (h, masked h, p*h temp, ab, gated) + in-kernel bf16 casts
    inter_bytes = tn * m * 4 * 3 + tn * 2 * d * 4 * 2 + tn * (din + m) * 2
    need = x_bytes + w_bytes + scratch_bytes + inter_bytes + (4 << 20)
    try:
        info = pltpu.get_tpu_info()
        cap = int(getattr(info, "vmem_capacity_bytes", 64 << 20))
    except Exception:
        cap = 64 << 20
    cap = max((cap * 2) // 3, 16 << 20)   # headroom for Mosaic scratch / spills
    return int(min(max(need, 16 << 20), cap))


def _spec(block_shape, index_map, bufs):
    """BlockSpec with an explicit pipeline depth; graceful fallback if the
    installed JAX does not accept pipeline_mode."""
    if bufs is not None:
        try:
            return pl.BlockSpec(block_shape, index_map,
                                pipeline_mode=pl.Buffered(bufs))
        except Exception:
            pass
    return pl.BlockSpec(block_shape, index_map)


def pack_params(params):
    """One-time parameter packing (done outside the per-call hot path):
    Wa||Wb concat, bf16 matmul operands, row-vector reshapes."""
    w_emb, b_emb, wa, wb, wc, wp, bp = params
    mlp_m = w_emb.shape[1]
    attn_d = wa.shape[1]
    n_cls = wp.shape[1]
    bf = jnp.bfloat16
    w_emb_in = w_emb.astype(bf)                                    # [Din, M]
    wab_in = jnp.concatenate([wa, wb], axis=1).astype(bf)          # [M, 2D]
    wc_row = wc.reshape(1, attn_d).astype(jnp.float32)             # [1, D]
    b_emb_in = b_emb.astype(jnp.float32).reshape(1, mlp_m)         # [1, M]
    wp_in = wp.astype(jnp.float32)                                 # [M, C]
    bp_in = bp.astype(jnp.float32).reshape(1, n_cls)               # [1, C]
    return (w_emb_in, b_emb_in, wab_in, wc_row, wp_in, bp_in)


def pure_mhim_forward(x, packed_params, *, tile_n=1024):
    """x: [B, N, Din] float32, packed_params from pack_params -> logits [B, C]."""
    B, N, Din = x.shape
    w_emb_in, b_emb_in, wab_in, wc_row, wp_in, bp_in = packed_params
    M = w_emb_in.shape[1]
    D = wc_row.shape[1]
    C = wp_in.shape[1]

    tn = _choose_tile(N, tile_n)
    nt = (N + tn - 1) // tn
    need_mask = (N % tn) != 0
    x_bufs = 3 if nt >= 3 else 2     # deeper x pipeline only when it can help

    kernel = functools.partial(_pure_mhim_kernel, attn_d=D, tile_n=tn,
                               n_valid=N, need_mask=need_mask)

    n_total = nt * tn
    flops = 2 * B * n_total * (Din * M + M * 2 * D) + B * n_total * (4 * M + 6 * D)
    bytes_accessed = (x.size * x.dtype.itemsize
                      + w_emb_in.size * 2 + wab_in.size * 2
                      + (b_emb_in.size + wc_row.size + wp_in.size + bp_in.size) * 4
                      + B * C * 4)
    cost = pl.CostEstimate(flops=int(flops),
                           transcendentals=int(B * n_total * (D + 2)),
                           bytes_accessed=int(bytes_accessed))
    vmem_limit = _derived_vmem_limit(tn, Din, M, D, C,
                                     x.dtype.itemsize, x_bufs, 1)

    def _build(use_buffered):
        xb = x_bufs if use_buffered else None
        wb = 1 if use_buffered else None          # single-buffer invariant weights
        grid_spec = pltpu.PrefetchScalarGridSpec(
            num_scalar_prefetch=0,
            grid=(B, nt),
            in_specs=[
                _spec((1, tn, Din), lambda b, n: (b, n, 0), xb),   # x tile
                _spec((Din, M), lambda b, n: (0, 0), wb),          # W_emb
                _spec((1, M), lambda b, n: (0, 0), wb),            # b_emb
                _spec((M, 2 * D), lambda b, n: (0, 0), wb),        # Wa || Wb
                _spec((1, D), lambda b, n: (0, 0), wb),            # wc as a row
                _spec((M, C), lambda b, n: (0, 0), wb),            # Wp
                _spec((1, C), lambda b, n: (0, 0), wb),            # b_p
            ],
            out_specs=pl.BlockSpec((1, 1, C), lambda b, n: (b, 0, 0)),
            scratch_shapes=[
                pltpu.VMEM((1, 1), jnp.float32),    # running max m
                pltpu.VMEM((1, 1), jnp.float32),    # running sum l
                pltpu.VMEM((1, M), jnp.float32),    # running exp-weighted sum of h
            ],
        )
        return pl.pallas_call(
            kernel,
            out_shape=jax.ShapeDtypeStruct((B, 1, C), jnp.float32),
            grid_spec=grid_spec,
            compiler_params=pltpu.CompilerParams(
                dimension_semantics=("parallel", "arbitrary"),
                vmem_limit_bytes=vmem_limit),
            cost_estimate=cost,
        )

    args = (x, w_emb_in, b_emb_in, wab_in, wc_row, wp_in, bp_in)
    try:
        out = _build(True)(*args)
    except Exception:
        # fall back to default double-buffered pipelining if the explicit
        # pipeline_mode path is rejected by this JAX / Mosaic version
        out = _build(False)(*args)
    return out.reshape(B, C)


def _xavier_normal(key, fan_in, fan_out):
    std = float(np.sqrt(2.0 / (fan_in + fan_out)))
    # stored as [in, out] (== torch weight [out, in] transposed)
    return jax.random.normal(key, (fan_in, fan_out), dtype=jnp.float32) * std


def init_params(key, input_dim, mlp_dim, n_classes, attn_D=128):
    ks = jax.random.split(key, 5)
    w_emb = _xavier_normal(ks[0], input_dim, mlp_dim)      # patch_to_emb Linear
    b_emb = jnp.zeros((1, mlp_dim), jnp.float32)           # zero-init bias
    wa = _xavier_normal(ks[1], mlp_dim, attn_D)            # attention_a (no bias)
    wb = _xavier_normal(ks[2], mlp_dim, attn_D)            # attention_b (no bias)
    wc = _xavier_normal(ks[3], attn_D, 1)                  # attention_c (no bias)
    wp = _xavier_normal(ks[4], mlp_dim, n_classes)         # predictor
    bp = jnp.zeros((1, n_classes), jnp.float32)
    return (w_emb, b_emb, wa, wb, wc, wp, bp)


def reference_forward(x, params):
    """Pure-JAX reference with the same dtype policy as the kernel
    (bf16 matmul operands, f32 accumulation, f32 elementwise/softmax)."""
    w_emb, b_emb, wa, wb, wc, wp, bp = params
    bf = jnp.bfloat16
    xb = x.astype(bf)
    h = jax.nn.relu(
        jnp.einsum('bnd,dm->bnm', xb, w_emb.astype(bf),
                   preferred_element_type=jnp.float32) + b_emb[None])
    hb = h.astype(bf)
    a = jax.nn.relu(jnp.einsum('bnm,mk->bnk', hb, wa.astype(bf),
                               preferred_element_type=jnp.float32))
    b = jax.nn.sigmoid(jnp.einsum('bnm,mk->bnk', hb, wb.astype(bf),
                                  preferred_element_type=jnp.float32))
    s = jnp.einsum('bnk,ko->bno', a * b, wc)[..., 0]        # [B, N] f32
    w = jax.nn.softmax(s, axis=-1)
    pooled = jnp.einsum('bn,bnm->bm', w, h)
    return jnp.einsum('bm,mc->bc', pooled, wp) + bp


if __name__ == "__main__":
    # Small shapes consistent with the module (attention hidden D=128 is hardcoded).
    B, N, INPUT_DIM, MLP_DIM, N_CLASSES = 2, 40, 64, 128, 2

    key = jax.random.PRNGKey(0)
    k_x, k_p = jax.random.split(key)
    x = jax.random.normal(k_x, (B, N, INPUT_DIM), dtype=jnp.float32)
    params = init_params(k_p, INPUT_DIM, MLP_DIM, N_CLASSES)
    packed = pack_params(params)   # one-time weight packing (not per call)

    # Check 1: default tiling -> single ragged tile (in-kernel masking, no pad).
    logits = pure_mhim_forward(x, packed)
    jax.block_until_ready(logits)
    ref = reference_forward(x, params)
    if not np.allclose(np.asarray(logits), np.asarray(ref), rtol=1e-3, atol=1e-3):
        raise AssertionError("Pallas kernel output does not match JAX reference")

    # Check 2: forced small tile -> multi-tile streaming online softmax with a
    # ragged (masked) last tile (40 % 16 != 0).
    logits2 = pure_mhim_forward(x, packed, tile_n=16)
    jax.block_until_ready(logits2)
    if not np.allclose(np.asarray(logits2), np.asarray(ref), rtol=1e-3, atol=1e-3):
        raise AssertionError("Pallas kernel (tiled/masked path) does not match reference")

    # Check 3: multi-tile streaming with no masking (N divisible by the tile).
    x3 = jax.random.normal(jax.random.PRNGKey(2), (B, 32, INPUT_DIM), jnp.float32)
    logits3 = pure_mhim_forward(x3, packed, tile_n=16)
    jax.block_until_ready(logits3)
    ref3 = reference_forward(x3, params)
    if not np.allclose(np.asarray(logits3), np.asarray(ref3), rtol=1e-3, atol=1e-3):
        raise AssertionError("Pallas kernel (tiled/unmasked path) does not match reference")

    print("KERNEL_OK")
</pallas_src>

<mosaic_0001>
module attributes {stable_mosaic.version = 11 : i64} {
  func.func @_pure_mhim_kernel(%arg0: i32, %arg1: i32, %arg2: memref<1x48x64xf32, #tpu.memory_space<vmem>>, %arg3: memref<64x128xbf16, #tpu.memory_space<vmem>>, %arg4: memref<1x128xf32, #tpu.memory_space<vmem>>, %arg5: memref<128x256xbf16, #tpu.memory_space<vmem>>, %arg6: memref<1x128xf32, #tpu.memory_space<vmem>>, %arg7: memref<128x2xf32, #tpu.memory_space<vmem>>, %arg8: memref<1x2xf32, #tpu.memory_space<vmem>>, %arg9: memref<1x1x2xf32, #tpu.memory_space<vmem>>, %arg10: memref<1x1xf32, #tpu.memory_space<vmem>>, %arg11: memref<1x1xf32, #tpu.memory_space<vmem>>, %arg12: memref<1x128xf32, #tpu.memory_space<vmem>>) attributes {dimension_semantics = [#tpu.dimension_semantics<parallel>, #tpu.dimension_semantics<arbitrary>], iteration_bounds = array<i64: 2, 1>, scalar_prefetch = 0 : i64, scratch_operands = 3 : i64, tpu.core_type = #tpu.core_type<tc>, window_params = [{pipeline_mode = #tpu.pipeline_mode<double_buffered>, transform_indices = @transform_0, window_bounds = array<i64: 1, 48, 64>}, {pipeline_mode = #tpu.pipeline_mode<synchronous>, transform_indices = @transform_1, window_bounds = array<i64: 64, 128>}, {pipeline_mode = #tpu.pipeline_mode<synchronous>, transform_indices = @transform_2, window_bounds = array<i64: 1, 128>}, {pipeline_mode = #tpu.pipeline_mode<synchronous>, transform_indices = @transform_3, window_bounds = array<i64: 128, 256>}, {pipeline_mode = #tpu.pipeline_mode<synchronous>, transform_indices = @transform_4, window_bounds = array<i64: 1, 128>}, {pipeline_mode = #tpu.pipeline_mode<synchronous>, transform_indices = @transform_5, window_bounds = array<i64: 128, 2>}, {pipeline_mode = #tpu.pipeline_mode<synchronous>, transform_indices = @transform_6, window_bounds = array<i64: 1, 2>}, {transform_indices = @transform_7, window_bounds = array<i64: 1, 1, 2>}]} {
    %c0_i32 = arith.constant 0 : i32
    %0 = arith.cmpi eq, %arg1, %c0_i32 : i32
    %1 = arith.extui %0 : i1 to i32
    %c0_i32_0 = arith.constant 0 : i32
    %2 = arith.cmpi ne, %1, %c0_i32_0 : i32
    scf.if %2 {
      %cst_35 = arith.constant -1.000000e+30 : f32
      %71 = vector.broadcast %cst_35 : f32 to vector<1x1xf32>
      %c0_36 = arith.constant 0 : index
      %c0_37 = arith.constant 0 : index
      %72 = vector.load %arg10[%c0_36, %c0_37] : memref<1x1xf32, #tpu.memory_space<vmem>>, vector<1x1xf32>
      tpu.vector_store %arg10[%c0_36, %c0_37], %71 {strides = array<i32>} : memref<1x1xf32, #tpu.memory_space<vmem>>, vector<1x1xf32>,
      %cst_38 = arith.constant 0.000000e+00 : f32
      %73 = vector.broadcast %cst_38 : f32 to vector<1x1xf32>
      %c0_39 = arith.constant 0 : index
      %c0_40 = arith.constant 0 : index
      %74 = vector.load %arg11[%c0_39, %c0_40] : memref<1x1xf32, #tpu.memory_space<vmem>>, vector<1x1xf32>
      tpu.vector_store %arg11[%c0_39, %c0_40], %73 {strides = array<i32>} : memref<1x1xf32, #tpu.memory_space<vmem>>, vector<1x1xf32>,
      %cst_41 = arith.constant 0.000000e+00 : f32
      %75 = vector.broadcast %cst_41 : f32 to vector<1x128xf32>
      %c0_42 = arith.constant 0 : index
      %c0_43 = arith.constant 0 : index
      %76 = vector.load %arg12[%c0_42, %c0_43] : memref<1x128xf32, #tpu.memory_space<vmem>>, vector<1x128xf32>
      tpu.vector_store %arg12[%c0_42, %c0_43], %75 {strides = array<i32>} : memref<1x128xf32, #tpu.memory_space<vmem>>, vector<1x128xf32>,
    } else {
    }
    %c0 = arith.constant 0 : index
    %c0_1 = arith.constant 0 : index
    %c0_2 = arith.constant 0 : index
    %3 = vector.load %arg2[%c0, %c0_1, %c0_2] : memref<1x48x64xf32, #tpu.memory_space<vmem>>, vector<1x48x64xf32>
    %4 = vector.shape_cast %3 : vector<1x48x64xf32> to vector<48x64xf32>
    %5 = arith.truncf %4 : vector<48x64xf32> to vector<48x64xbf16>
    %c0_3 = arith.constant 0 : index
    %c0_4 = arith.constant 0 : index
    %6 = vector.load %arg3[%c0_3, %c0_4] : memref<64x128xbf16, #tpu.memory_space<vmem>>, vector<64x128xbf16>
    %cst = arith.constant dense<0.000000e+00> : vector<48x128xf32>
    %7 = tpu.matmul %5, %6, %cst {dimension_numbers = #tpu.dot_dimension_numbers<[1], [0], [0], [1], [0, 0, 1, 1], [], []>} : vector<48x64xbf16>, vector<64x128xbf16>, vector<48x128xf32> -> vector<48x128xf32>
    %c0_5 = arith.constant 0 : index
    %c0_6 = arith.constant 0 : index
    %8 = vector.load %arg4[%c0_5, %c0_6] : memref<1x128xf32, #tpu.memory_space<vmem>>, vector<1x128xf32>
    %9 = vector.broadcast %8 : vector<1x128xf32> to vector<48x128xf32>
    %10 = arith.addf %7, %9 : vector<48x128xf32>
    %cst_7 = arith.constant 0.000000e+00 : f32
    %11 = vector.broadcast %cst_7 : f32 to vector<48x128xf32>
    %12 = arith.maximumf %10, %11 : vector<48x128xf32>
    %13 = tpu.iota {dimensions = array<i32: 0>} : vector<48x1xi32>
    %c48_i32 = arith.constant 48 : i32
    %14 = arith.muli %arg1, %c48_i32 : i32
    %15 = vector.broadcast %14 : i32 to vector<48x1xi32>
    %16 = arith.addi %13, %15 : vector<48x1xi32>
    %c40_i32 = arith.constant 40 : i32
    %17 = vector.broadcast %c40_i32 : i32 to vector<48x1xi32>
    %18 = arith.cmpi slt, %16, %17 : vector<48x1xi32>
    %cst_8 = arith.constant 0.000000e+00 : f32
    %19 = vector.shape_cast %18 : vector<48x1xi1> to vector<48x1xi1>
    %20 = vector.broadcast %19 : vector<48x1xi1> to vector<48x128xi1>
    %21 = vector.broadcast %cst_8 : f32 to vector<48x128xf32>
    %22 = arith.select %20, %12, %21 : vector<48x128xi1>, vector<48x128xf32>
    %23 = arith.truncf %22 : vector<48x128xf32> to vector<48x128xbf16>
    %c0_9 = arith.constant 0 : index
    %c0_10 = arith.constant 0 : index
    %24 = vector.load %arg5[%c0_9, %c0_10] : memref<128x256xbf16, #tpu.memory_space<vmem>>, vector<128x256xbf16>
    %cst_11 = arith.constant dense<0.000000e+00> : vector<48x256xf32>
    %25 = tpu.matmul %23, %24, %cst_11 {dimension_numbers = #tpu.dot_dimension_numbers<[1], [0], [0], [1], [0, 0, 1, 1], [], []>} : vector<48x128xbf16>, vector<128x256xbf16>, vector<48x256xf32> -> vector<48x256xf32>
    %26 = vector.extract_strided_slice %25 {offsets = [0, 0], sizes = [48, 128], strides = [1, 1]} : vector<48x256xf32> to vector<48x128xf32>
    %cst_12 = arith.constant 0.000000e+00 : f32
    %27 = vector.broadcast %cst_12 : f32 to vector<48x128xf32>
    %28 = arith.maximumf %26, %27 : vector<48x128xf32>
    %29 = vector.extract_strided_slice %25 {offsets = [0, 128], sizes = [48, 128], strides = [1, 1]} : vector<48x256xf32> to vector<48x128xf32>
    %30 = arith.negf %29 : vector<48x128xf32>
    %31 = math.exp %30 : vector<48x128xf32>
    %cst_13 = arith.constant 1.000000e+00 : f32
    %32 = vector.broadcast %cst_13 : f32 to vector<48x128xf32>
    %33 = arith.addf %32, %31 : vector<48x128xf32>
    %34 = arith.divf %32, %33 : vector<48x128xf32>
    %35 = arith.mulf %28, %34 : vector<48x128xf32>
    %c0_14 = arith.constant 0 : index
    %c0_15 = arith.constant 0 : index
    %36 = vector.load %arg6[%c0_14, %c0_15] : memref<1x128xf32, #tpu.memory_space<vmem>>, vector<1x128xf32>
    %37 = vector.broadcast %36 : vector<1x128xf32> to vector<48x128xf32>
    %38 = arith.mulf %35, %37 : vector<48x128xf32>
    %cst_16 = arith.constant dense<0.000000e+00> : vector<48xf32>
    %39 = vector.multi_reduction <add>, %38, %cst_16 [1] : vector<48x128xf32> to vector<48xf32>
    %40 = vector.shape_cast %39 : vector<48xf32> to vector<48x1xf32>
    %cst_17 = arith.constant -1.000000e+30 : f32
    %41 = vector.broadcast %cst_17 : f32 to vector<48x1xf32>
    %42 = arith.select %18, %40, %41 : vector<48x1xi1>, vector<48x1xf32>
    %c0_18 = arith.constant 0 : index
    %c0_19 = arith.constant 0 : index
    %43 = vector.load %arg10[%c0_18, %c0_19] : memref<1x1xf32, #tpu.memory_space<vmem>>, vector<1x1xf32>
    %cst_20 = arith.constant dense<0xFF800000> : vector<1xf32>
    %44 = vector.multi_reduction <maximumf>, %42, %cst_20 [0] : vector<48x1xf32> to vector<1xf32>
    %45 = vector.shape_cast %44 : vector<1xf32> to vector<1x1xf32>
    %46 = arith.maximumf %43, %45 : vector<1x1xf32>
    %47 = arith.subf %43, %46 : vector<1x1xf32>
    %48 = math.exp %47 : vector<1x1xf32>
    %49 = vector.broadcast %46 : vector<1x1xf32> to vector<48x1xf32>
    %50 = arith.subf %42, %49 : vector<48x1xf32>
    %51 = math.exp %50 : vector<48x1xf32>
    %c0_21 = arith.constant 0 : index
    %c0_22 = arith.constant 0 : index
    %52 = vector.load %arg11[%c0_21, %c0_22] : memref<1x1xf32, #tpu.memory_space<vmem>>, vector<1x1xf32>
    %53 = arith.mulf %48, %52 : vector<1x1xf32>
    %cst_23 = arith.constant dense<0.000000e+00> : vector<1xf32>
    %54 = vector.multi_reduction <add>, %51, %cst_23 [0] : vector<48x1xf32> to vector<1xf32>
    %55 = vector.shape_cast %54 : vector<1xf32> to vector<1x1xf32>
    %56 = arith.addf %53, %55 : vector<1x1xf32>
    %c0_24 = arith.constant 0 : index
    %c0_25 = arith.constant 0 : index
    %57 = vector.load %arg11[%c0_24, %c0_25] : memref<1x1xf32, #tpu.memory_space<vmem>>, vector<1x1xf32>
    tpu.vector_store %arg11[%c0_24, %c0_25], %56 {strides = array<i32>} : memref<1x1xf32, #tpu.memory_space<vmem>>, vector<1x1xf32>,
    %c0_26 = arith.constant 0 : index
    %c0_27 = arith.constant 0 : index
    %58 = vector.load %arg12[%c0_26, %c0_27] : memref<1x128xf32, #tpu.memory_space<vmem>>, vector<1x128xf32>
    %59 = vector.broadcast %48 : vector<1x1xf32> to vector<1x128xf32>
    %60 = arith.mulf %59, %58 : vector<1x128xf32>
    %61 = vector.broadcast %51 : vector<48x1xf32> to vector<48x128xf32>
    %62 = arith.mulf %61, %22 : vector<48x128xf32>
    %cst_28 = arith.constant dense<0.000000e+00> : vector<128xf32>
    %63 = vector.multi_reduction <add>, %62, %cst_28 [0] : vector<48x128xf32> to vector<128xf32>
    %64 = vector.shape_cast %63 : vector<128xf32> to vector<1x128xf32>
    %65 = arith.addf %60, %64 : vector<1x128xf32>
    %c0_29 = arith.constant 0 : index
    %c0_30 = arith.constant 0 : index
    %66 = vector.load %arg12[%c0_29, %c0_30] : memref<1x128xf32, #tpu.memory_space<vmem>>, vector<1x128xf32>
    tpu.vector_store %arg12[%c0_29, %c0_30], %65 {strides = array<i32>} : memref<1x128xf32, #tpu.memory_space<vmem>>, vector<1x128xf32>,
    %c0_31 = arith.constant 0 : index
    %c0_32 = arith.constant 0 : index
    %67 = vector.load %arg10[%c0_31, %c0_32] : memref<1x1xf32, #tpu.memory_space<vmem>>, vector<1x1xf32>
    tpu.vector_store %arg10[%c0_31, %c0_32], %46 {strides = array<i32>} : memref<1x1xf32, #tpu.memory_space<vmem>>, vector<1x1xf32>,
    %c0_i32_33 = arith.constant 0 : i32
    %68 = arith.cmpi eq, %arg1, %c0_i32_33 : i32
    %69 = arith.extui %68 : i1 to i32
    %c0_i32_34 = arith.constant 0 : i32
    %70 = arith.cmpi ne, %69, %c0_i32_34 : i32
    scf.if %70 {
      %c0_35 = arith.constant 0 : index
      %c0_36 = arith.constant 0 : index
      %71 = vector.load %arg12[%c0_35, %c0_36] : memref<1x128xf32, #tpu.memory_space<vmem>>, vector<1x128xf32>
      %c0_37 = arith.constant 0 : index
      %c0_38 = arith.constant 0 : index
      %72 = vector.load %arg11[%c0_37, %c0_38] : memref<1x1xf32, #tpu.memory_space<vmem>>, vector<1x1xf32>
      %73 = vector.broadcast %72 : vector<1x1xf32> to vector<1x128xf32>
      %74 = arith.divf %71, %73 : vector<1x128xf32>
      %c0_39 = arith.constant 0 : index
      %c0_40 = arith.constant 0 : index
      %75 = vector.load %arg7[%c0_39, %c0_40] : memref<128x2xf32, #tpu.memory_space<vmem>>, vector<128x2xf32>
      %cst_41 = arith.constant dense<0.000000e+00> : vector<1x2xf32>
      %76 = tpu.matmul %74, %75, %cst_41 {dimension_numbers = #tpu.dot_dimension_numbers<[1], [0], [0], [1], [0, 0, 1, 1], [], []>} : vector<1x128xf32>, vector<128x2xf32>, vector<1x2xf32> -> vector<1x2xf32>
      %c0_42 = arith.constant 0 : index
      %c0_43 = arith.constant 0 : index
      %77 = vector.load %arg8[%c0_42, %c0_43] : memref<1x2xf32, #tpu.memory_space<vmem>>, vector<1x2xf32>
      %78 = arith.addf %76, %77 : vector<1x2xf32>
      %c0_44 = arith.constant 0 : index
      %c0_45 = arith.constant 0 : index
      %c0_46 = arith.constant 0 : index
      %79 = vector.load %arg9[%c0_44, %c0_45, %c0_46] : memref<1x1x2xf32, #tpu.memory_space<vmem>>, vector<1x1x2xf32>
      %80 = vector.shape_cast %79 : vector<1x1x2xf32> to vector<1x2xf32>
      %81 = vector.shape_cast %78 : vector<1x2xf32> to vector<1x1x2xf32>
      tpu.vector_store %arg9[%c0_44, %c0_45, %c0_46], %81 {strides = array<i32>} : memref<1x1x2xf32, #tpu.memory_space<vmem>>, vector<1x1x2xf32>,
    } else {
    }
    return
  }
  func.func @transform_0(%arg0: i32, %arg1: i32) -> (i32, i32, i32) {
    %c0_i32 = arith.constant 0 : i32
    %c0_i32_0 = arith.constant 0 : i32
    return %arg0, %arg1, %c0_i32 : i32, i32, i32
  }
  func.func @transform_1(%arg0: i32, %arg1: i32) -> (i32, i32) {
    %c0_i32 = arith.constant 0 : i32
    %c0_i32_0 = arith.constant 0 : i32
    %c0_i32_1 = arith.constant 0 : i32
    return %c0_i32, %c0_i32_0 : i32, i32
  }
  func.func @transform_2(%arg0: i32, %arg1: i32) -> (i32, i32) {
    %c0_i32 = arith.constant 0 : i32
    %c0_i32_0 = arith.constant 0 : i32
    %c0_i32_1 = arith.constant 0 : i32
    return %c0_i32, %c0_i32_0 : i32, i32
  }
  func.func @transform_3(%arg0: i32, %arg1: i32) -> (i32, i32) {
    %c0_i32 = arith.constant 0 : i32
    %c0_i32_0 = arith.constant 0 : i32
    %c0_i32_1 = arith.constant 0 : i32
    return %c0_i32, %c0_i32_0 : i32, i32
  }
  func.func @transform_4(%arg0: i32, %arg1: i32) -> (i32, i32) {
    %c0_i32 = arith.constant 0 : i32
    %c0_i32_0 = arith.constant 0 : i32
    %c0_i32_1 = arith.constant 0 : i32
    return %c0_i32, %c0_i32_0 : i32, i32
  }
  func.func @transform_5(%arg0: i32, %arg1: i32) -> (i32, i32) {
    %c0_i32 = arith.constant 0 : i32
    %c0_i32_0 = arith.constant 0 : i32
    %c0_i32_1 = arith.constant 0 : i32
    return %c0_i32, %c0_i32_0 : i32, i32
  }
  func.func @transform_6(%arg0: i32, %arg1: i32) -> (i32, i32) {
    %c0_i32 = arith.constant 0 : i32
    %c0_i32_0 = arith.constant 0 : i32
    %c0_i32_1 = arith.constant 0 : i32
    return %c0_i32, %c0_i32_0 : i32, i32
  }
  func.func @transform_7(%arg0: i32, %arg1: i32) -> (i32, i32, i32) {
    %c0_i32 = arith.constant 0 : i32
    %c0_i32_0 = arith.constant 0 : i32
    %c0_i32_1 = arith.constant 0 : i32
    return %arg0, %c0_i32, %c0_i32_0 : i32, i32, i32
  }
}

module attributes {stable_mosaic.version = 11 : i64} {
  func.func @_pure_mhim_kernel(%arg0: i32, %arg1: i32, %arg2: memref<1x48x64xf32, #tpu.memory_space<vmem>>, %arg3: memref<64x128xbf16, #tpu.memory_space<vmem>>, %arg4: memref<1x128xf32, #tpu.memory_space<vmem>>, %arg5: memref<128x256xbf16, #tpu.memory_space<vmem>>, %arg6: memref<1x128xf32, #tpu.memory_space<vmem>>, %arg7: memref<128x2xf32, #tpu.memory_space<vmem>>, %arg8: memref<1x2xf32, #tpu.memory_space<vmem>>, %arg9: memref<1x1x2xf32, #tpu.memory_space<vmem>>, %arg10: memref<1x1xf32, #tpu.memory_space<vmem>>, %arg11: memref<1x1xf32, #tpu.memory_space<vmem>>, %arg12: memref<1x128xf32, #tpu.memory_space<vmem>>) attributes {dimension_semantics = [#tpu.dimension_semantics<parallel>, #tpu.dimension_semantics<arbitrary>], iteration_bounds = array<i64: 2, 1>, scalar_prefetch = 0 : i64, scratch_operands = 3 : i64, tpu.core_type = #tpu.core_type<tc>, window_params = [{transform_indices = @transform_0, window_bounds = array<i64: 1, 48, 64>}, {pipeline_mode = #tpu.pipeline_mode<synchronous>, transform_indices = @transform_1, window_bounds = array<i64: 64, 128>}, {pipeline_mode = #tpu.pipeline_mode<synchronous>, transform_indices = @transform_2, window_bounds = array<i64: 1, 128>}, {pipeline_mode = #tpu.pipeline_mode<synchronous>, transform_indices = @transform_3, window_bounds = array<i64: 128, 256>}, {pipeline_mode = #tpu.pipeline_mode<synchronous>, transform_indices = @transform_4, window_bounds = array<i64: 1, 128>}, {pipeline_mode = #tpu.pipeline_mode<synchronous>, transform_indices = @transform_5, window_bounds = array<i64: 128, 2>}, {pipeline_mode = #tpu.pipeline_mode<synchronous>, transform_indices = @transform_6, window_bounds = array<i64: 1, 2>}, {transform_indices = @transform_7, window_bounds = array<i64: 1, 1, 2>}]} {
    %c0_i32 = arith.constant 0 : i32
    %0 = arith.cmpi eq, %arg1, %c0_i32 : i32
    %1 = arith.extui %0 : i1 to i32
    %c0_i32_0 = arith.constant 0 : i32
    %2 = arith.cmpi ne, %1, %c0_i32_0 : i32
    scf.if %2 {
      %cst_35 = arith.constant -1.000000e+30 : f32
      %71 = vector.broadcast %cst_35 : f32 to vector<1x1xf32>
      %c0_36 = arith.constant 0 : index
      %c0_37 = arith.constant 0 : index
      %72 = vector.load %arg10[%c0_36, %c0_37] : memref<1x1xf32, #tpu.memory_space<vmem>>, vector<1x1xf32>
      tpu.vector_store %arg10[%c0_36, %c0_37], %71 {strides = array<i32>} : memref<1x1xf32, #tpu.memory_space<vmem>>, vector<1x1xf32>,
      %cst_38 = arith.constant 0.000000e+00 : f32
      %73 = vector.broadcast %cst_38 : f32 to vector<1x1xf32>
      %c0_39 = arith.constant 0 : index
      %c0_40 = arith.constant 0 : index
      %74 = vector.load %arg11[%c0_39, %c0_40] : memref<1x1xf32, #tpu.memory_space<vmem>>, vector<1x1xf32>
      tpu.vector_store %arg11[%c0_39, %c0_40], %73 {strides = array<i32>} : memref<1x1xf32, #tpu.memory_space<vmem>>, vector<1x1xf32>,
      %cst_41 = arith.constant 0.000000e+00 : f32
      %75 = vector.broadcast %cst_41 : f32 to vector<1x128xf32>
      %c0_42 = arith.constant 0 : index
      %c0_43 = arith.constant 0 : index
      %76 = vector.load %arg12[%c0_42, %c0_43] : memref<1x128xf32, #tpu.memory_space<vmem>>, vector<1x128xf32>
      tpu.vector_store %arg12[%c0_42, %c0_43], %75 {strides = array<i32>} : memref<1x128xf32, #tpu.memory_space<vmem>>, vector<1x128xf32>,
    } else {
    }
    %c0 = arith.constant 0 : index
    %c0_1 = arith.constant 0 : index
    %c0_2 = arith.constant 0 : index
    %3 = vector.load %arg2[%c0, %c0_1, %c0_2] : memref<1x48x64xf32, #tpu.memory_space<vmem>>, vector<1x48x64xf32>
    %4 = vector.shape_cast %3 : vector<1x48x64xf32> to vector<48x64xf32>
    %5 = arith.truncf %4 : vector<48x64xf32> to vector<48x64xbf16>
    %c0_3 = arith.constant 0 : index
    %c0_4 = arith.constant 0 : index
    %6 = vector.load %arg3[%c0_3, %c0_4] : memref<64x128xbf16, #tpu.memory_space<vmem>>, vector<64x128xbf16>
    %cst = arith.constant dense<0.000000e+00> : vector<48x128xf32>
    %7 = tpu.matmul %5, %6, %cst {dimension_numbers = #tpu.dot_dimension_numbers<[1], [0], [0], [1], [0, 0, 1, 1], [], []>} : vector<48x64xbf16>, vector<64x128xbf16>, vector<48x128xf32> -> vector<48x128xf32>
    %c0_5 = arith.constant 0 : index
    %c0_6 = arith.constant 0 : index
    %8 = vector.load %arg4[%c0_5, %c0_6] : memref<1x128xf32, #tpu.memory_space<vmem>>, vector<1x128xf32>
    %9 = vector.broadcast %8 : vector<1x128xf32> to vector<48x128xf32>
    %10 = arith.addf %7, %9 : vector<48x128xf32>
    %cst_7 = arith.constant 0.000000e+00 : f32
    %11 = vector.broadcast %cst_7 : f32 to vector<48x128xf32>
    %12 = arith.maximumf %10, %11 : vector<48x128xf32>
    %13 = tpu.iota {dimensions = array<i32: 0>} : vector<48x1xi32>
    %c48_i32 = arith.constant 48 : i32
    %14 = arith.muli %arg1, %c48_i32 : i32
    %15 = vector.broadcast %14 : i32 to vector<48x1xi32>
    %16 = arith.addi %13, %15 : vector<48x1xi32>
    %c40_i32 = arith.constant 40 : i32
    %17 = vector.broadcast %c40_i32 : i32 to vector<48x1xi32>
    %18 = arith.cmpi slt, %16, %17 : vector<48x1xi32>
    %cst_8 = arith.constant 0.000000e+00 : f32
    %19 = vector.shape_cast %18 : vector<48x1xi1> to vector<48x1xi1>
    %20 = vector.broadcast %19 : vector<48x1xi1> to vector<48x128xi1>
    %21 = vector.broadcast %cst_8 : f32 to vector<48x128xf32>
    %22 = arith.select %20, %12, %21 : vector<48x128xi1>, vector<48x128xf32>
    %23 = arith.truncf %22 : vector<48x128xf32> to vector<48x128xbf16>
    %c0_9 = arith.constant 0 : index
    %c0_10 = arith.constant 0 : index
    %24 = vector.load %arg5[%c0_9, %c0_10] : memref<128x256xbf16, #tpu.memory_space<vmem>>, vector<128x256xbf16>
    %cst_11 = arith.constant dense<0.000000e+00> : vector<48x256xf32>
    %25 = tpu.matmul %23, %24, %cst_11 {dimension_numbers = #tpu.dot_dimension_numbers<[1], [0], [0], [1], [0, 0, 1, 1], [], []>} : vector<48x128xbf16>, vector<128x256xbf16>, vector<48x256xf32> -> vector<48x256xf32>
    %26 = vector.extract_strided_slice %25 {offsets = [0, 0], sizes = [48, 128], strides = [1, 1]} : vector<48x256xf32> to vector<48x128xf32>
    %cst_12 = arith.constant 0.000000e+00 : f32
    %27 = vector.broadcast %cst_12 : f32 to vector<48x128xf32>
    %28 = arith.maximumf %26, %27 : vector<48x128xf32>
    %29 = vector.extract_strided_slice %25 {offsets = [0, 128], sizes = [48, 128], strides = [1, 1]} : vector<48x256xf32> to vector<48x128xf32>
    %30 = arith.negf %29 : vector<48x128xf32>
    %31 = math.exp %30 : vector<48x128xf32>
    %cst_13 = arith.constant 1.000000e+00 : f32
    %32 = vector.broadcast %cst_13 : f32 to vector<48x128xf32>
    %33 = arith.addf %32, %31 : vector<48x128xf32>
    %34 = arith.divf %32, %33 : vector<48x128xf32>
    %35 = arith.mulf %28, %34 : vector<48x128xf32>
    %c0_14 = arith.constant 0 : index
    %c0_15 = arith.constant 0 : index
    %36 = vector.load %arg6[%c0_14, %c0_15] : memref<1x128xf32, #tpu.memory_space<vmem>>, vector<1x128xf32>
    %37 = vector.broadcast %36 : vector<1x128xf32> to vector<48x128xf32>
    %38 = arith.mulf %35, %37 : vector<48x128xf32>
    %cst_16 = arith.constant dense<0.000000e+00> : vector<48xf32>
    %39 = vector.multi_reduction <add>, %38, %cst_16 [1] : vector<48x128xf32> to vector<48xf32>
    %40 = vector.shape_cast %39 : vector<48xf32> to vector<48x1xf32>
    %cst_17 = arith.constant -1.000000e+30 : f32
    %41 = vector.broadcast %cst_17 : f32 to vector<48x1xf32>
    %42 = arith.select %18, %40, %41 : vector<48x1xi1>, vector<48x1xf32>
    %c0_18 = arith.constant 0 : index
    %c0_19 = arith.constant 0 : index
    %43 = vector.load %arg10[%c0_18, %c0_19] : memref<1x1xf32, #tpu.memory_space<vmem>>, vector<1x1xf32>
    %cst_20 = arith.constant dense<0xFF800000> : vector<1xf32>
    %44 = vector.multi_reduction <maximumf>, %42, %cst_20 [0] : vector<48x1xf32> to vector<1xf32>
    %45 = vector.shape_cast %44 : vector<1xf32> to vector<1x1xf32>
    %46 = arith.maximumf %43, %45 : vector<1x1xf32>
    %47 = arith.subf %43, %46 : vector<1x1xf32>
    %48 = math.exp %47 : vector<1x1xf32>
    %49 = vector.broadcast %46 : vector<1x1xf32> to vector<48x1xf32>
    %50 = arith.subf %42, %49 : vector<48x1xf32>
    %51 = math.exp %50 : vector<48x1xf32>
    %c0_21 = arith.constant 0 : index
    %c0_22 = arith.constant 0 : index
    %52 = vector.load %arg11[%c0_21, %c0_22] : memref<1x1xf32, #tpu.memory_space<vmem>>, vector<1x1xf32>
    %53 = arith.mulf %48, %52 : vector<1x1xf32>
    %cst_23 = arith.constant dense<0.000000e+00> : vector<1xf32>
    %54 = vector.multi_reduction <add>, %51, %cst_23 [0] : vector<48x1xf32> to vector<1xf32>
    %55 = vector.shape_cast %54 : vector<1xf32> to vector<1x1xf32>
    %56 = arith.addf %53, %55 : vector<1x1xf32>
    %c0_24 = arith.constant 0 : index
    %c0_25 = arith.constant 0 : index
    %57 = vector.load %arg11[%c0_24, %c0_25] : memref<1x1xf32, #tpu.memory_space<vmem>>, vector<1x1xf32>
    tpu.vector_store %arg11[%c0_24, %c0_25], %56 {strides = array<i32>} : memref<1x1xf32, #tpu.memory_space<vmem>>, vector<1x1xf32>,
    %c0_26 = arith.constant 0 : index
    %c0_27 = arith.constant 0 : index
    %58 = vector.load %arg12[%c0_26, %c0_27] : memref<1x128xf32, #tpu.memory_space<vmem>>, vector<1x128xf32>
    %59 = vector.broadcast %48 : vector<1x1xf32> to vector<1x128xf32>
    %60 = arith.mulf %59, %58 : vector<1x128xf32>
    %61 = vector.broadcast %51 : vector<48x1xf32> to vector<48x128xf32>
    %62 = arith.mulf %61, %22 : vector<48x128xf32>
    %cst_28 = arith.constant dense<0.000000e+00> : vector<128xf32>
    %63 = vector.multi_reduction <add>, %62, %cst_28 [0] : vector<48x128xf32> to vector<128xf32>
    %64 = vector.shape_cast %63 : vector<128xf32> to vector<1x128xf32>
    %65 = arith.addf %60, %64 : vector<1x128xf32>
    %c0_29 = arith.constant 0 : index
    %c0_30 = arith.constant 0 : index
    %66 = vector.load %arg12[%c0_29, %c0_30] : memref<1x128xf32, #tpu.memory_space<vmem>>, vector<1x128xf32>
    tpu.vector_store %arg12[%c0_29, %c0_30], %65 {strides = array<i32>} : memref<1x128xf32, #tpu.memory_space<vmem>>, vector<1x128xf32>,
    %c0_31 = arith.constant 0 : index
    %c0_32 = arith.constant 0 : index
    %67 = vector.load %arg10[%c0_31, %c0_32] : memref<1x1xf32, #tpu.memory_space<vmem>>, vector<1x1xf32>
    tpu.vector_store %arg10[%c0_31, %c0_32], %46 {strides = array<i32>} : memref<1x1xf32, #tpu.memory_space<vmem>>, vector<1x1xf32>,
    %c0_i32_33 = arith.constant 0 : i32
    %68 = arith.cmpi eq, %arg1, %c0_i32_33 : i32
    %69 = arith.extui %68 : i1 to i32
    %c0_i32_34 = arith.constant 0 : i32
    %70 = arith.cmpi ne, %69, %c0_i32_34 : i32
    scf.if %70 {
      %c0_35 = arith.constant 0 : index
      %c0_36 = arith.constant 0 : index
      %71 = vector.load %arg12[%c0_35, %c0_36] : memref<1x128xf32, #tpu.memory_space<vmem>>, vector<1x128xf32>
      %c0_37 = arith.constant 0 : index
      %c0_38 = arith.constant 0 : index
      %72 = vector.load %arg11[%c0_37, %c0_38] : memref<1x1xf32, #tpu.memory_space<vmem>>, vector<1x1xf32>
      %73 = vector.broadcast %72 : vector<1x1xf32> to vector<1x128xf32>
      %74 = arith.divf %71, %73 : vector<1x128xf32>
      %c0_39 = arith.constant 0 : index
      %c0_40 = arith.constant 0 : index
      %75 = vector.load %arg7[%c0_39, %c0_40] : memref<128x2xf32, #tpu.memory_space<vmem>>, vector<128x2xf32>
      %cst_41 = arith.constant dense<0.000000e+00> : vector<1x2xf32>
      %76 = tpu.matmul %74, %75, %cst_41 {dimension_numbers = #tpu.dot_dimension_numbers<[1], [0], [0], [1], [0, 0, 1, 1], [], []>} : vector<1x128xf32>, vector<128x2xf32>, vector<1x2xf32> -> vector<1x2xf32>
      %c0_42 = arith.constant 0 : index
      %c0_43 = arith.constant 0 : index
      %77 = vector.load %arg8[%c0_42, %c0_43] : memref<1x2xf32, #tpu.memory_space<vmem>>, vector<1x2xf32>
      %78 = arith.addf %76, %77 : vector<1x2xf32>
      %c0_44 = arith.constant 0 : index
      %c0_45 = arith.constant 0 : index
      %c0_46 = arith.constant 0 : index
      %79 = vector.load %arg9[%c0_44, %c0_45, %c0_46] : memref<1x1x2xf32, #tpu.memory_space<vmem>>, vector<1x1x2xf32>
      %80 = vector.shape_cast %79 : vector<1x1x2xf32> to vector<1x2xf32>
      %81 = vector.shape_cast %78 : vector<1x2xf32> to vector<1x1x2xf32>
      tpu.vector_store %arg9[%c0_44, %c0_45, %c0_46], %81 {strides = array<i32>} : memref<1x1x2xf32, #tpu.memory_space<vmem>>, vector<1x1x2xf32>,
    } else {
    }
    return
  }
  func.func @transform_0(%arg0: i32, %arg1: i32) -> (i32, i32, i32) {
    %c0_i32 = arith.constant 0 : i32
    %c0_i32_0 = arith.constant 0 : i32
    return %arg0, %arg1, %c0_i32 : i32, i32, i32
  }
  func.func @transform_1(%arg0: i32, %arg1: i32) -> (i32, i32) {
    %c0_i32 = arith.constant 0 : i32
    %c0_i32_0 = arith.constant 0 : i32
    %c0_i32_1 = arith.constant 0 : i32
    return %c0_i32, %c0_i32_0 : i32, i32
  }
  func.func @transform_2(%arg0: i32, %arg1: i32) -> (i32, i32) {
    %c0_i32 = arith.constant 0 : i32
    %c0_i32_0 = arith.constant 0 : i32
    %c0_i32_1 = arith.constant 0 : i32
    return %c0_i32, %c0_i32_0 : i32, i32
  }
  func.func @transform_3(%arg0: i32, %arg1: i32) -> (i32, i32) {
    %c0_i32 = arith.constant 0 : i32
    %c0_i32_0 = arith.constant 0 : i32
    %c0_i32_1 = arith.constant 0 : i32
    return %c0_i32, %c0_i32_0 : i32, i32
  }
  func.func @transform_4(%arg0: i32, %arg1: i32) -> (i32, i32) {
    %c0_i32 = arith.constant 0 : i32
    %c0_i32_0 = arith.constant 0 : i32
    %c0_i32_1 = arith.constant 0 : i32
    return %c0_i32, %c0_i32_0 : i32, i32
  }
  func.func @transform_5(%arg0: i32, %arg1: i32) -> (i32, i32) {
    %c0_i32 = arith.constant 0 : i32
    %c0_i32_0 = arith.constant 0 : i32
    %c0_i32_1 = arith.constant 0 : i32
    return %c0_i32, %c0_i32_0 : i32, i32
  }
  func.func @transform_6(%arg0: i32, %arg1: i32) -> (i32, i32) {
    %c0_i32 = arith.constant 0 : i32
    %c0_i32_0 = arith.constant 0 : i32
    %c0_i32_1 = arith.constant 0 : i32
    return %c0_i32, %c0_i32_0 : i32, i32
  }
  func.func @transform_7(%arg0: i32, %arg1: i32) -> (i32, i32, i32) {
    %c0_i32 = arith.constant 0 : i32
    %c0_i32_0 = arith.constant 0 : i32
    %c0_i32_1 = arith.constant 0 : i32
    return %arg0, %c0_i32, %c0_i32_0 : i32, i32, i32
  }
}

</mosaic_0001>

<llo_original>
// kernel: tpu_custom_call.1
$region0: #{tpu_custom_call.1}
  #allocation0 [shape = 'u32[]', space=smem, size = 0x4, offset = 0x4, fixed_abs, tag = 'smem constant byte address 0x4 - core index']
  #allocation1 [shape = 'u32[144,128]{1,0:T(1,128)}', space=vmem, size = 0x12000, scoped, tag = 'internal scratch']
  #allocation2 [shape = 'f32[1,1]{1,0:T(1,128)}', space=vmem, size = 0x200, scoped, tag = 'scratch operand']
  #allocation3 [shape = 'f32[1,1]{1,0:T(1,128)}', space=vmem, size = 0x200, scoped, tag = 'scratch operand']
  #allocation4 [shape = 'f32[1,128]{1,0:T(1,128)}', space=vmem, size = 0x200, scoped, tag = 'scratch operand']
  %s0 = inlined_call_operand.hbm [shape: f32[2,40,64], index: 0, kind: input, shape index: {}]
  %s1 = inlined_call_operand.hbm [shape: bf16[64,128], index: 1, kind: input, shape index: {}]
  %s2 = inlined_call_operand.vmem [shape: f32[1,128], index: 2, kind: input, shape index: {}]
  %s3 = inlined_call_operand.vmem [shape: bf16[128,256], index: 3, kind: input, shape index: {}]
  %s4 = inlined_call_operand.vmem [shape: f32[1,128], index: 4, kind: input, shape index: {}]
  %s5 = inlined_call_operand.vmem [shape: f32[128,2], index: 5, kind: input, shape index: {}]
  %s6 = inlined_call_operand.vmem [shape: f32[1,2], index: 6, kind: input, shape index: {}]
  %s7 = inlined_call_operand.hbm [shape: f32[2,1,2], index: 7, kind: output, shape index: {}]
  %s8 = sld [smem:[#allocation0]]
  $region77: #{tpu_custom_call.1} parent=0
    _
  %s10 = ssub.s32 1, %s8
  %s11 = scalar_select 0, %s10, %s8
  $region1: #{tpu_custom_call.1} parent=0
    #allocation5 [shape = 'u8[49152]{0}', space=vmem, size = 0xc000, scoped, tag = 'input window, operand 0']
    #allocation6 [shape = 's32[2]{0}', space=sflag, size = 0x8, scoped, tag = 'scoped memory for tpu_custom_call.1']
    #allocation7 [shape = 's32[2]{0}', space=sflag, size = 0x8, scoped, tag = 'scoped memory for tpu_custom_call.1']
    #allocation8 [shape = 'u8[16384]{0}', space=vmem, size = 0x4000, scoped, tag = 'input window, operand 1, single buffered']
    #allocation9 [shape = 's32[1]{0}', space=sflag, size = 0x4, scoped, tag = 'scoped memory for tpu_custom_call.1']
    #allocation10 [shape = 'u8[1024]{0}', space=vmem, size = 0x400, scoped, tag = 'output window, operand 0']
    %12 = vsyncpa [#allocation6], 0
    %s13 = scalar_lea.sflag [#allocation6], 1
    %14 = vsyncpa %s13, 0
    %15 = vsyncpa [#allocation9], 0
    %16 = vsyncpa [#allocation7], 0
    %s17 = scalar_lea.sflag [#allocation7], 1
    %18 = vsyncpa %s17, 0
    loop: start=0, step=1, limit=4
    $region2: #{tpu_custom_call.1} parent=1 // loop_pre_header
      _
    $region3: #{tpu_custom_call.1} parent=1 // loop_header
      %s20 = sphi 0, %s24
      %p21 = scmp.ge.s32.totalorder %s20, 4
      %s27 = sphi 0, %s39
      %s28 = sphi 0, %s35
      %s29 = sphi 0, %s27
      %s30 = sphi 0, %s28
      %s31 = sphi 0, %s29
      %s32 = sphi 0, %s30
      %s44 = sphi 0, %s46
      %s47 = sphi 0, %s44
      %s48 = sphi 0, %s47
      %s64 = sphi 0, %s48
      %s68 = sphi 0, %s68
      %s70 = sphi 0, %s68
      %s71 = sphi 0, %s70
      %s85 = sphi 0, %s71
      %s89 = sphi 0, %s89
      %s91 = sphi 0, %s89
      %s92 = sphi 0, %s91
      %s106 = sphi 0, %s92
      %s110 = sphi 0, %s110
      %s112 = sphi 0, %s110
      %s113 = sphi 0, %s112
      %s127 = sphi 0, %s113
      %s131 = sphi 0, %s131
      %s133 = sphi 0, %s131
      %s134 = sphi 0, %s133
      %s148 = sphi 0, %s134
      %s152 = sphi 0, %s152
      %s154 = sphi 0, %s152
      %s155 = sphi 0, %s154
      %s169 = sphi 0, %s155
      %s173 = sphi 0, %s173
      %s175 = sphi 0, %s173
      %s176 = sphi 0, %s175
      %s190 = sphi 0, %s176
      %s196 = sphi 0, %s198
      %s199 = sphi 0, %s196
      %s200 = sphi 0, %s199
      %s216 = sphi 0, %s200
    $region4: #{tpu_custom_call.1} parent=1 // loop_header_branch
      %23 = sbr.rel (%p21) target = $region8
    $region5: #{tpu_custom_call.1} parent=1 // loop_body
      %s25 = ssub.s32 %s20, 1
      %s26 = ssub.s32 %s20, 2
      %s33 = sadd.s32 1, %s28
      %p34 = scmp.ge.s32.totalorder %s33, 1
      %s35 = scalar_select %p34, 0, %s33
      %s36 = sadd.s32 1, %s27
      %s37 = scalar_select %p34, %s36, %s27
      %p38 = scmp.ge.s32.totalorder %s37, 2
      %s39 = scalar_select %p38, 0, %s37
      %s40 = ssub.s32 %s27, %s39
      %s41 = ssub.s32 %s28, %s35
      %s42 = sor.u32 %s40, %s41
      %p43 = scmp.eq.s32.totalorder %s42, 0
      %s45 = sadd.s32 %s44, 1
      %s46 = scalar_select %p43, %s44, %s45
      %p49 = pneg %p43
      %p50 = scmp.eq.s32.totalorder %s20, 1
      %p51 = por %p49, %p50
      %p52 = scmp.ne.s32.totalorder %s44, %s47
      %p53 = scmp.eq.s32.totalorder %s20, 0
      %p54 = por %p52, %p53
      %p55 = scmp.ne.s32.totalorder %s44, %s47
      %p56 = scmp.eq.s32.totalorder %s25, 1
      %p57 = por %p55, %p56
      %p58 = scmp.ne.s32.totalorder %s47, %s48
      %p59 = scmp.eq.s32.totalorder %s25, 0
      %p60 = por %p58, %p59
      %p61 = scmp.ne.s32.totalorder %s47, %s48
      %p62 = scmp.eq.s32.totalorder %s26, 1
      %p63 = por %p61, %p62
      %p65 = scmp.ne.s32.totalorder %s48, %s64
      %p66 = scmp.eq.s32.totalorder %s26, 0
      %p67 = por %p65, %p66
      %s69 = sadd.s32 %s68, 1
      %p72 = scmp.eq.s32.totalorder %s20, 1
      %p73 = scmp.ne.s32.totalorder %s68, %s70
      %p74 = scmp.eq.s32.totalorder %s20, 0
      %p75 = por %p73, %p74
      %p76 = scmp.ne.s32.totalorder %s68, %s70
      %p77 = scmp.eq.s32.totalorder %s25, 1
      %p78 = por %p76, %p77
      %p79 = scmp.ne.s32.totalorder %s70, %s71
      %p80 = scmp.eq.s32.totalorder %s25, 0
      %p81 = por %p79, %p80
      %p82 = scmp.ne.s32.totalorder %s70, %s71
      %p83 = scmp.eq.s32.totalorder %s26, 1
      %p84 = por %p82, %p83
      %p86 = scmp.ne.s32.totalorder %s71, %s85
      %p87 = scmp.eq.s32.totalorder %s26, 0
      %p88 = por %p86, %p87
      %s90 = sadd.s32 %s89, 1
      %p93 = scmp.eq.s32.totalorder %s20, 1
      %p94 = scmp.ne.s32.totalorder %s89, %s91
      %p95 = scmp.eq.s32.totalorder %s20, 0
      %p96 = por %p94, %p95
      %p97 = scmp.ne.s32.totalorder %s89, %s91
      %p98 = scmp.eq.s32.totalorder %s25, 1
      %p99 = por %p97, %p98
      %p100 = scmp.ne.s32.totalorder %s91, %s92
      %p101 = scmp.eq.s32.totalorder %s25, 0
      %p102 = por %p100, %p101
      %p103 = scmp.ne.s32.totalorder %s91, %s92
      %p104 = scmp.eq.s32.totalorder %s26, 1
      %p105 = por %p103, %p104
      %p107 = scmp.ne.s32.totalorder %s92, %s106
      %p108 = scmp.eq.s32.totalorder %s26, 0
      %p109 = por %p107, %p108
      %s111 = sadd.s32 %s110, 1
      %p114 = scmp.eq.s32.totalorder %s20, 1
      %p115 = scmp.ne.s32.totalorder %s110, %s112
      %p116 = scmp.eq.s32.totalorder %s20, 0
      %p117 = por %p115, %p116
      %p118 = scmp.ne.s32.totalorder %s110, %s112
      %p119 = scmp.eq.s32.totalorder %s25, 1
      %p120 = por %p118, %p119
      %p121 = scmp.ne.s32.totalorder %s112, %s113
      %p122 = scmp.eq.s32.totalorder %s25, 0
      %p123 = por %p121, %p122
      %p124 = scmp.ne.s32.totalorder %s112, %s113
      %p125 = scmp.eq.s32.totalorder %s26, 1
      %p126 = por %p124, %p125
      %p128 = scmp.ne.s32.totalorder %s113, %s127
      %p129 = scmp.eq.s32.totalorder %s26, 0
      %p130 = por %p128, %p129
      %s132 = sadd.s32 %s131, 1
      %p135 = scmp.eq.s32.totalorder %s20, 1
      %p136 = scmp.ne.s32.totalorder %s131, %s133
      %p137 = scmp.eq.s32.totalorder %s20, 0
      %p138 = por %p136, %p137
      %p139 = scmp.ne.s32.totalorder %s131, %s133
      %p140 = scmp.eq.s32.totalorder %s25, 1
      %p141 = por %p139, %p140
      %p142 = scmp.ne.s32.totalorder %s133, %s134
      %p143 = scmp.eq.s32.totalorder %s25, 0
      %p144 = por %p142, %p143
      %p145 = scmp.ne.s32.totalorder %s133, %s134
      %p146 = scmp.eq.s32.totalorder %s26, 1
      %p147 = por %p145, %p146
      %p149 = scmp.ne.s32.totalorder %s134, %s148
      %p150 = scmp.eq.s32.totalorder %s26, 0
      %p151 = por %p149, %p150
      %s153 = sadd.s32 %s152, 1
      %p156 = scmp.eq.s32.totalorder %s20, 1
      %p157 = scmp.ne.s32.totalorder %s152, %s154
      %p158 = scmp.eq.s32.totalorder %s20, 0
      %p159 = por %p157, %p158
      %p160 = scmp.ne.s32.totalorder %s152, %s154
      %p161 = scmp.eq.s32.totalorder %s25, 1
      %p162 = por %p160, %p161
      %p163 = scmp.ne.s32.totalorder %s154, %s155
      %p164 = scmp.eq.s32.totalorder %s25, 0
      %p165 = por %p163, %p164
      %p166 = scmp.ne.s32.totalorder %s154, %s155
      %p167 = scmp.eq.s32.totalorder %s26, 1
      %p168 = por %p166, %p167
      %p170 = scmp.ne.s32.totalorder %s155, %s169
      %p171 = scmp.eq.s32.totalorder %s26, 0
      %p172 = por %p170, %p171
      %s174 = sadd.s32 %s173, 1
      %p177 = scmp.eq.s32.totalorder %s20, 1
      %p178 = scmp.ne.s32.totalorder %s173, %s175
      %p179 = scmp.eq.s32.totalorder %s20, 0
      %p180 = por %p178, %p179
      %p181 = scmp.ne.s32.totalorder %s173, %s175
      %p182 = scmp.eq.s32.totalorder %s25, 1
      %p183 = por %p181, %p182
      %p184 = scmp.ne.s32.totalorder %s175, %s176
      %p185 = scmp.eq.s32.totalorder %s25, 0
      %p186 = por %p184, %p185
      %p187 = scmp.ne.s32.totalorder %s175, %s176
      %p188 = scmp.eq.s32.totalorder %s26, 1
      %p189 = por %p187, %p188
      %p191 = scmp.ne.s32.totalorder %s176, %s190
      %p192 = scmp.eq.s32.totalorder %s26, 0
      %p193 = por %p191, %p192
      %s194 = ssub.s32 %s27, %s39
      %p195 = scmp.eq.s32.totalorder %s194, 0
      %s197 = sadd.s32 %s196, 1
      %s198 = scalar_select %p195, %s196, %s197
      %p201 = pneg %p195
      %p202 = scmp.eq.s32.totalorder %s20, 1
      %p203 = por %p201, %p202
      %p204 = scmp.ne.s32.totalorder %s196, %s199
      %p205 = scmp.eq.s32.totalorder %s20, 0
      %p206 = por %p204, %p205
      %p207 = scmp.ne.s32.totalorder %s196, %s199
      %p208 = scmp.eq.s32.totalorder %s25, 1
      %p209 = por %p207, %p208
      %p210 = scmp.ne.s32.totalorder %s199, %s200
      %p211 = scmp.eq.s32.totalorder %s25, 0
      %p212 = por %p210, %p211
      %p213 = scmp.ne.s32.totalorder %s199, %s200
      %p214 = scmp.eq.s32.totalorder %s26, 1
      %p215 = por %p213, %p214
      %p217 = scmp.ne.s32.totalorder %s200, %s216
      %p218 = scmp.eq.s32.totalorder %s26, 0
      %p219 = por %p217, %p218
      %p220 = scmp.le.s32.totalorder 1, %s20
      %p221 = scmp.lt.s32.totalorder %s20, 3
      %p222 = pnand %p220, %p221
      %p223 = pneg %p222
      // Predicated region
      $region9: #{tpu_custom_call.1} parent=5 // pred_check
        _
      $region10: #{tpu_custom_call.1} parent=5 // pred_check_branch
        %225 = sbr.rel (%p222) target = $region12
      $region11: #{tpu_custom_call.1} parent=5 // pred_region
        %s226 = ssub.s32 %s20, 1
        // Predicated region
        $region13: #{tpu_custom_call.1} parent=11 // pred_check
          %p227 = pneg %p81
        $region14: #{tpu_custom_call.1} parent=11 // pred_check_branch
          %229 = sbr.rel (%p227) target = $region16
        $region15: #{tpu_custom_call.1} parent=11 // pred_region
          %s231 = ssub.s32 512, 512
          %232 = vsyncadd [#allocation9], %s231
          %s233 = sshll.u32 [#allocation8], 4
          %s234 = int_to_ptr.vmem [resolvable:$true] %s233
          %239 = dma.hbm_to_vmem [thread:$0]  %s1, 512, %s234, [#allocation9], 64, 64, 4
        $region16: #{tpu_custom_call.1} parent=11 // pred_fallthru
          _
        // Predicated region
        $region17: #{tpu_custom_call.1} parent=11 // pred_check
          %p240 = pneg %p102
        $region18: #{tpu_custom_call.1} parent=11 // pred_check_branch
          %242 = sbr.rel (%p240) target = $region20
        $region19: #{tpu_custom_call.1} parent=11 // pred_region
          _
        $region20: #{tpu_custom_call.1} parent=11 // pred_fallthru
          _
        // Predicated region
        $region21: #{tpu_custom_call.1} parent=11 // pred_check
          %p243 = pneg %p123
        $region22: #{tpu_custom_call.1} parent=11 // pred_check_branch
          %245 = sbr.rel (%p243) target = $region24
        $region23: #{tpu_custom_call.1} parent=11 // pred_region
          _
        $region24: #{tpu_custom_call.1} parent=11 // pred_fallthru
          _
        // Predicated region
        $region25: #{tpu_custom_call.1} parent=11 // pred_check
          %p246 = pneg %p144
        $region26: #{tpu_custom_call.1} parent=11 // pred_check_branch
          %248 = sbr.rel (%p246) target = $region28
        $region27: #{tpu_custom_call.1} parent=11 // pred_region
          _
        $region28: #{tpu_custom_call.1} parent=11 // pred_fallthru
          _
        // Predicated region
        $region29: #{tpu_custom_call.1} parent=11 // pred_check
          %p249 = pneg %p165
        $region30: #{tpu_custom_call.1} parent=11 // pred_check_branch
          %251 = sbr.rel (%p249) target = $region32
        $region31: #{tpu_custom_call.1} parent=11 // pred_region
          _
        $region32: #{tpu_custom_call.1} parent=11 // pred_fallthru
          _
        // Predicated region
        $region33: #{tpu_custom_call.1} parent=11 // pred_check
          %p252 = pneg %p186
        $region34: #{tpu_custom_call.1} parent=11 // pred_check_branch
          %254 = sbr.rel (%p252) target = $region36
        $region35: #{tpu_custom_call.1} parent=11 // pred_region
          _
        $region36: #{tpu_custom_call.1} parent=11 // pred_fallthru
          _
      $region12: #{tpu_custom_call.1} parent=5 // pred_fallthru
        _
      %p255 = scmp.lt.s32.totalorder %s20, 2
      // Predicated region
      $region37: #{tpu_custom_call.1} parent=5 // pred_check
        %p256 = pneg %p255
      $region38: #{tpu_custom_call.1} parent=5 // pred_check_branch
        %258 = sbr.rel (%p256) target = $region40
      $region39: #{tpu_custom_call.1} parent=5 // pred_region
        // Predicated region
        $region41: #{tpu_custom_call.1} parent=39 // pred_check
          %p259 = pneg %p54
        $region42: #{tpu_custom_call.1} parent=39 // pred_check_branch
          %261 = sbr.rel (%p259) target = $region44
        $region43: #{tpu_custom_call.1} parent=39 // pred_region
          %s262 = sand.u32 %s44, 1
          %s263 = scalar_lea.sflag [#allocation6], %s262
          %s264 = sand.u32 %s44, 1
          %s265 = smul.addr %s264, 48
          %s266 = scalar_lea.vmem [#allocation5], %s265
          %s267 = smul.u32 6, %s28
          %s268 = ssub.s32 5, %s267
          %s269 = smul.u32 128, %s268
          %s271 = ssub.s32 768, %s269
          %272 = vsyncadd %s263, %s271
          %p273 = scmp.ne.s32.totalorder 0, %s269
          %s274 = smul.addr %s27, 5
          %s275 = sadd.s32 %s267, %s274
          %s276 = smul.addr %s275, 128
          %s277 = scalar_lea.hbm %s0, %s276
          %s278 = smul.u32 8, %s268
          %s279 = sshll.u32 %s266, 4
          %s280 = int_to_ptr.vmem [resolvable:$true] %s279
          %s281 = sshll.u32 %s278, 4
          %285 = dma.hbm_to_vmem [thread:$0]  (%p273), %s277, %s281, %s280, %s263, 128, 128, 8
        $region44: #{tpu_custom_call.1} parent=39 // pred_fallthru
          _
      $region40: #{tpu_custom_call.1} parent=5 // pred_fallthru
        _
      %p286 = scmp.le.s32.totalorder 1, %s20
      %p287 = scmp.lt.s32.totalorder %s20, 3
      %p288 = pnand %p286, %p287
      %p289 = pneg %p288
      // Predicated region
      $region45: #{tpu_custom_call.1} parent=5 // pred_check
        _
      $region46: #{tpu_custom_call.1} parent=5 // pred_check_branch
        %291 = sbr.rel (%p288) target = $region48
      $region47: #{tpu_custom_call.1} parent=5 // pred_region
        %s292 = ssub.s32 %s20, 1
        %s293 = sand.u32 %s47, 1
        %s294 = scalar_lea.sflag [#allocation6], %s293
        %s295 = sand.u32 %s47, 1
        %s296 = smul.addr %s295, 48
        %s297 = scalar_lea.vmem [#allocation5], %s296
        // Predicated region
        $region49: #{tpu_custom_call.1} parent=47 // pred_check
          %p298 = pneg %p60
        $region50: #{tpu_custom_call.1} parent=47 // pred_check_branch
          %300 = sbr.rel (%p298) target = $region52
        $region51: #{tpu_custom_call.1} parent=47 // pred_region
          %301 = dma.done %s294, 768
        $region52: #{tpu_custom_call.1} parent=47 // pred_fallthru
          _
        // Predicated region
        $region53: #{tpu_custom_call.1} parent=47 // pred_check
          %p302 = pneg %p81
        $region54: #{tpu_custom_call.1} parent=47 // pred_check_branch
          %304 = sbr.rel (%p302) target = $region56
        $region55: #{tpu_custom_call.1} parent=47 // pred_region
          %305 = dma.done [#allocation9], 512
        $region56: #{tpu_custom_call.1} parent=47 // pred_fallthru
          _
        %s306 = sand.u32 %s47, 1
        %s307 = scalar_lea.sflag [#allocation6], %s306
        %s308 = sand.u32 %s47, 1
        %s309 = smul.addr %s308, 48
        %s310 = scalar_lea.vmem [#allocation5], %s309
        %p311 = pneg %p60
        %p312 = pneg %p57
        %p313 = pneg %p81
        %p314 = pneg %p78
        %p315 = pneg %p102
        %p316 = pneg %p99
        %p317 = pneg %p123
        %p318 = pneg %p120
        %p319 = pneg %p144
        %p320 = pneg %p141
        %p321 = pneg %p165
        %p322 = pneg %p162
        %p323 = pneg %p186
        %p324 = pneg %p183
        %p325 = pneg %p212
        %p326 = pneg %p209
        %s327 = sand.u32 %s199, 1
        %s328 = scalar_lea.sflag [#allocation7], %s327
        %s329 = sand.u32 %s199, 1
        %s330 = scalar_lea.vmem [#allocation10], %s329
        %s331 = smul.u32 6, %s30
        %s332 = ssub.s32 5, %s331
        %s333 = smul.u32 128, %s332
        %p335 = scmp.eq.s32.totalorder %s30, 0
        // Predicated region
        $region57: #{tpu_custom_call.1} parent=47 // pred_check
          %p336 = pneg %p335
        $region58: #{tpu_custom_call.1} parent=47 // pred_check_branch
          %338 = sbr.rel (%p336) target = $region60
        $region59: #{tpu_custom_call.1} parent=47 // pred_region
          %vm339 = vcmask 0
          %340 = vst.msk [vmem:[#allocation2] sm:$0x1] %vm339, -1e+30
          %341 = vst.msk [vmem:[#allocation3] sm:$0x1] %vm339, 0.0
          %342 = vst [vmem:[#allocation4] sm:$0x1] 0.0
        $region60: #{tpu_custom_call.1} parent=47 // pred_fallthru
          _
        %v343 = vld [vmem:[%s297] sm:$0xff]
        %v344 = vld [vmem:[%s297 + $0x8] sm:$0xff]
        %v345 = vld [vmem:[%s297 + $0x10] sm:$0xff]
        %v346 = vld [vmem:[%s297 + $0x18] sm:$0xff]
        %v347 = vld [vmem:[%s297 + $0x20] sm:$0xff]
        %v348 = vld [vmem:[%s297 + $0x28] sm:$0xff]
        %v349 = vpack.c.bf16 %v344, %v343
        %v350 = vpack.c.bf16 %v346, %v345
        %v351 = vpack.c.bf16 %v348, %v347
        %v352 = vld [vmem:[#allocation8] sm:$0xf]
        %v353 = vld [vmem:[#allocation8 + $0x4] sm:$0xf]
        %v354 = vld [vmem:[#allocation8 + $0x8] sm:$0xf]
        %v355 = vld [vmem:[#allocation8 + $0xc] sm:$0xf]
        %v356 = vld [vmem:[#allocation8 + $0x10] sm:$0xf]
        %v357 = vld [vmem:[#allocation8 + $0x14] sm:$0xf]
        %v358 = vld [vmem:[#allocation8 + $0x18] sm:$0xf]
        %v359 = vld [vmem:[#allocation8 + $0x1c] sm:$0xf]
        %v360 = vld [vmem:[%s2] sm:$0x1]
        %v362 = vlaneseq
        %v363 = vshrl.u32 %v362, 7
        %v364 = vsub.s32 0, %v363
        %v365 = vrot.slane %v360, %v364
        %v375 = vunpack.c.l.b16 %v352
        %v376 = vunpack.c.l.b16 %v353
        %v377 = vunpack.c.l.b16 %v354
        %v378 = vunpack.c.l.b16 %v355
        %v379 = vunpack.c.l.b16 %v356
        %v380 = vunpack.c.l.b16 %v357
        %v381 = vunpack.c.l.b16 %v358
        %v382 = vunpack.c.l.b16 %v359
        %v383 = vpack.c.b16 %v376, %v375
        %v384 = vpack.c.b16 %v378, %v377
        %v385 = vpack.c.b16 %v380, %v379
        %v386 = vpack.c.b16 %v382, %v381
        %vm391 = vcmask 523264
        %v393 = vsel %vm391, %v349, 0
        %v396 = vsel %vm391, %v350, 0
        %v399 = vsel %vm391, %v351, 0
        %401 = vmatprep.subr.bf16.mxu0 0
        %402 = vmatpush1.bf16.msra.mxu0 %v383
        %403 = vmatprep.subr.bf16.mxu0 0
        %404 = vmatpush1.bf16.msra.mxu0 %v384
        %405 = vmatprep.subr.bf16.mxu0 0
        %406 = vmatpush1.bf16.msra.mxu0 %v385
        %407 = vmatprep.subr.bf16.mxu0 0
        %408 = vmatpush1.bf16.msra.mxu0 %v386
        %409 = vmatprep.subr.bf16.mxu0 0
        %410 = vmatpush1.bf16.msra.mxu0 0
        %411 = vmatprep.subr.bf16.mxu0 0
        %412 = vmatpush1.bf16.msra.mxu0 0
        %413 = vmatprep.subr.bf16.mxu0 0
        %414 = vmatpush1.bf16.msra.mxu0 0
        %415 = vmatprep.subr.bf16.mxu0 0
        %416 = vmatpush1.bf16.msra.mxu0 0
        %417 = vmatprep.subr.bf16.mxu0 0
        %418 = vmatpush1.bf16.msra.mxu0 0
        %419 = vmatprep.subr.bf16.mxu0 0
        %420 = vmatpush1.bf16.msra.mxu0 0
        %421 = vmatprep.subr.bf16.mxu0 0
        %422 = vmatpush1.bf16.msra.mxu0 0
        %423 = vmatprep.subr.bf16.mxu0 0
        %424 = vmatpush1.bf16.msra.mxu0 0
        %425 = vmatprep.subr.bf16.mxu0 0
        %426 = vmatpush1.bf16.msra.mxu0 0
        %427 = vmatprep.subr.bf16.mxu0 0
        %428 = vmatpush1.bf16.msra.mxu0 0
        %429 = vmatprep.subr.bf16.mxu0 0
        %430 = vmatpush1.bf16.msra.mxu0 0
        %431 = vmatprep.subr.bf16.mxu0 0
        %432 = vmatpush1.bf16.msra.mxu0 0
        %433 = vmatprep.mubr.bf16.mxu0 0
        %434 = vmatmul.mubr.bf16.gmra.mrb[0].mxu0 %v393
        %v435 = vpop.f32.mrb[0].mxu0
        %v436 = vadd.f32 %v365, %v435
        %v437 = vpop.f32.mrb[0].mxu0
        %v438 = vpop.f32.mrb[0].mxu0
        %v439 = vadd.f32 %v365, %v438
        %v440 = vpop.f32.mrb[0].mxu0
        %441 = vmatprep.mubr.bf16.mxu0 0
        %442 = vmatmul.mubr.bf16.gmra.mrb[0].mxu0 %v396
        %v443 = vpop.f32.mrb[0].mxu0
        %v444 = vadd.f32 %v365, %v443
        %v445 = vpop.f32.mrb[0].mxu0
        %v446 = vpop.f32.mrb[0].mxu0
        %v447 = vadd.f32 %v365, %v446
        %v448 = vpop.f32.mrb[0].mxu0
        %449 = vmatprep.mubr.bf16.mxu0 0
        %450 = vmatmul.mubr.bf16.gmra.mrb[0].mxu0 %v399
        %v451 = vpop.f32.mrb[0].mxu0
        %v452 = vadd.f32 %v365, %v451
        %v453 = vpop.f32.mrb[0].mxu0
        %v454 = vpop.f32.mrb[0].mxu0
        %v455 = vadd.f32 %v365, %v454
        %v456 = vpop.f32.mrb[0].mxu0
        %457 = vdwg.mxu0
        %v458 = vmax.f32 %v436, 0.0
        %v459 = vmax.f32 %v439, 0.0
        %v460 = vmax.f32 %v444, 0.0
        %v461 = vmax.f32 %v447, 0.0
        %v462 = vmax.f32 %v452, 0.0
        %v463 = vmax.f32 %v455, 0.0
        %v464 = vlaneseq
        %v465 = vshrl.u32 %v464, 7
        %v466 = vadd.s32 %v465, 8
        %v467 = vadd.s32 %v465, 16
        %v468 = vadd.s32 %v465, 24
        %v469 = vadd.s32 %v465, 32
        %v470 = vadd.s32 %v465, 40
        %s471 = smul.u32 %s30, 48
        %v472 = vstv %s471
        %v473 = vadd.s32 %v465, %v472
        %v474 = vadd.s32 %v466, %v472
        %v475 = vadd.s32 %v467, %v472
        %v476 = vadd.s32 %v468, %v472
        %v477 = vadd.s32 %v469, %v472
        %v478 = vadd.s32 %v470, %v472
        %vm479 = vcmp.lt.s32.totalorder %v473, 40
        %vm480 = vcmp.lt.s32.totalorder %v474, 40
        %vm481 = vcmp.lt.s32.totalorder %v475, 40
        %vm482 = vcmp.lt.s32.totalorder %v476, 40
        %vm483 = vcmp.lt.s32.totalorder %v477, 40
        %vm484 = vcmp.lt.s32.totalorder %v478, 40
        %v485 = vsel %vm479, 1, 0
        %v486 = vsel %vm480, 1, 0
        %v487 = vsel %vm481, 1, 0
        %v488 = vsel %vm482, 1, 0
        %v489 = vsel %vm483, 1, 0
        %v490 = vsel %vm484, 1, 0
        %vm491 = vcmp.eq.s32.totalorder %v485, 1
        %vm492 = vcmp.eq.s32.totalorder %v486, 1
        %vm493 = vcmp.eq.s32.totalorder %v487, 1
        %vm494 = vcmp.eq.s32.totalorder %v488, 1
        %vm495 = vcmp.eq.s32.totalorder %v489, 1
        %vm496 = vcmp.eq.s32.totalorder %v490, 1
        %v497 = vsel %vm491, %v458, 0.0
        %v498 = vsel %vm492, %v459, 0.0
        %v499 = vsel %vm493, %v460, 0.0
        %v500 = vsel %vm494, %v461, 0.0
        %v501 = vsel %vm495, %v462, 0.0
        %v502 = vsel %vm496, %v463, 0.0
        %v503 = vpack.c.bf16 %v498, %v497
        %v504 = vpack.c.bf16 %v500, %v499
        %v505 = vpack.c.bf16 %v502, %v501
        %v506 = vld [vmem:[%s3] sm:$0xff]
        %v507 = vld [vmem:[%s3 + $0x8] sm:$0xff]
        %v508 = vld [vmem:[%s3 + $0x10] sm:$0xff]
        %v509 = vld [vmem:[%s3 + $0x18] sm:$0xff]
        %v510 = vld [vmem:[%s3 + $0x20] sm:$0xff]
        %v511 = vld [vmem:[%s3 + $0x28] sm:$0xff]
        %v512 = vld [vmem:[%s3 + $0x30] sm:$0xff]
        %v513 = vld [vmem:[%s3 + $0x38] sm:$0xff]
        %v514 = vld [vmem:[%s3 + $0x40] sm:$0xff]
        %v515 = vld [vmem:[%s3 + $0x48] sm:$0xff]
        %v516 = vld [vmem:[%s3 + $0x50] sm:$0xff]
        %v517 = vld [vmem:[%s3 + $0x58] sm:$0xff]
        %v518 = vld [vmem:[%s3 + $0x60] sm:$0xff]
        %v519 = vld [vmem:[%s3 + $0x68] sm:$0xff]
        %v520 = vld [vmem:[%s3 + $0x70] sm:$0xff]
        %v521 = vld [vmem:[%s3 + $0x78] sm:$0xff]
        %v538 = vunpack.c.l.b16 %v506
        %v539 = vunpack.c.h.b16 %v506
        %v540 = vunpack.c.l.b16 %v507
        %v541 = vunpack.c.h.b16 %v507
        %v542 = vunpack.c.l.b16 %v508
        %v543 = vunpack.c.h.b16 %v508
        %v544 = vunpack.c.l.b16 %v509
        %v545 = vunpack.c.h.b16 %v509
        %v546 = vunpack.c.l.b16 %v510
        %v547 = vunpack.c.h.b16 %v510
        %v548 = vunpack.c.l.b16 %v511
        %v549 = vunpack.c.h.b16 %v511
        %v550 = vunpack.c.l.b16 %v512
        %v551 = vunpack.c.h.b16 %v512
        %v552 = vunpack.c.l.b16 %v513
        %v553 = vunpack.c.h.b16 %v513
        %v554 = vunpack.c.l.b16 %v514
        %v555 = vunpack.c.h.b16 %v514
        %v556 = vunpack.c.l.b16 %v515
        %v557 = vunpack.c.h.b16 %v515
        %v558 = vunpack.c.l.b16 %v516
        %v559 = vunpack.c.h.b16 %v516
        %v560 = vunpack.c.l.b16 %v517
        %v561 = vunpack.c.h.b16 %v517
        %v562 = vunpack.c.l.b16 %v518
        %v563 = vunpack.c.h.b16 %v518
        %v564 = vunpack.c.l.b16 %v519
        %v565 = vunpack.c.h.b16 %v519
        %v566 = vunpack.c.l.b16 %v520
        %v567 = vunpack.c.h.b16 %v520
        %v568 = vunpack.c.l.b16 %v521
        %v569 = vunpack.c.h.b16 %v521
        %v570 = vpack.c.b16 %v540, %v538
        %v571 = vpack.c.b16 %v541, %v539
        %v572 = vpack.c.b16 %v544, %v542
        %v573 = vpack.c.b16 %v545, %v543
        %v574 = vpack.c.b16 %v548, %v546
        %v575 = vpack.c.b16 %v549, %v547
        %v576 = vpack.c.b16 %v552, %v550
        %v577 = vpack.c.b16 %v553, %v551
        %v578 = vpack.c.b16 %v556, %v554
        %v579 = vpack.c.b16 %v557, %v555
        %v580 = vpack.c.b16 %v560, %v558
        %v581 = vpack.c.b16 %v561, %v559
        %v582 = vpack.c.b16 %v564, %v562
        %v583 = vpack.c.b16 %v565, %v563
        %v584 = vpack.c.b16 %v568, %v566
        %v585 = vpack.c.b16 %v569, %v567
        %602 = vmatprep.subr.bf16.mxu0 %v571
        %603 = vmatpush1.bf16.msra.mxu0 %v570
        %604 = vmatprep.subr.bf16.mxu0 %v573
        %605 = vmatpush1.bf16.msra.mxu0 %v572
        %606 = vmatprep.subr.bf16.mxu0 %v575
        %607 = vmatpush1.bf16.msra.mxu0 %v574
        %608 = vmatprep.subr.bf16.mxu0 %v577
        %609 = vmatpush1.bf16.msra.mxu0 %v576
        %610 = vmatprep.subr.bf16.mxu0 %v579
        %611 = vmatpush1.bf16.msra.mxu0 %v578
        %612 = vmatprep.subr.bf16.mxu0 %v581
        %613 = vmatpush1.bf16.msra.mxu0 %v580
        %614 = vmatprep.subr.bf16.mxu0 %v583
        %615 = vmatpush1.bf16.msra.mxu0 %v582
        %616 = vmatprep.subr.bf16.mxu0 %v585
        %617 = vmatpush1.bf16.msra.mxu0 %v584
        %618 = vmatprep.subr.bf16.mxu0 0
        %619 = vmatpush1.bf16.msra.mxu0 0
        %620 = vmatprep.subr.bf16.mxu0 0
        %621 = vmatpush1.bf16.msra.mxu0 0
        %622 = vmatprep.subr.bf16.mxu0 0
        %623 = vmatpush1.bf16.msra.mxu0 0
        %624 = vmatprep.subr.bf16.mxu0 0
        %625 = vmatpush1.bf16.msra.mxu0 0
        %626 = vmatprep.subr.bf16.mxu0 0
        %627 = vmatpush1.bf16.msra.mxu0 0
        %628 = vmatprep.subr.bf16.mxu0 0
        %629 = vmatpush1.bf16.msra.mxu0 0
        %630 = vmatprep.subr.bf16.mxu0 0
        %631 = vmatpush1.bf16.msra.mxu0 0
        %632 = vmatprep.subr.bf16.mxu0 0
        %633 = vmatpush1.bf16.msra.mxu0 0
        %634 = vmatprep.mubr.bf16.mxu0 0
        %635 = vmatmul.mubr.bf16.gmra.mrb[0].mxu0 %v503
        %v636 = vpop.f32.mrb[0].mxu0
        %v637 = vadd.f32 0.0, %v636
        %v638 = vpop.f32.mrb[0].mxu0
        %v639 = vadd.f32 0.0, %v638
        %v640 = vpop.f32.mrb[0].mxu0
        %v641 = vadd.f32 0.0, %v640
        %v642 = vpop.f32.mrb[0].mxu0
        %v643 = vadd.f32 0.0, %v642
        %644 = vmatprep.mubr.bf16.mxu0 0
        %645 = vmatmul.mubr.bf16.gmra.mrb[0].mxu0 %v504
        %v646 = vpop.f32.mrb[0].mxu0
        %v647 = vadd.f32 0.0, %v646
        %v648 = vpop.f32.mrb[0].mxu0
        %v649 = vadd.f32 0.0, %v648
        %v650 = vpop.f32.mrb[0].mxu0
        %v651 = vadd.f32 0.0, %v650
        %v652 = vpop.f32.mrb[0].mxu0
        %v653 = vadd.f32 0.0, %v652
        %654 = vmatprep.mubr.bf16.mxu0 0
        %655 = vmatmul.mubr.bf16.gmra.mrb[0].mxu0 %v505
        %v656 = vpop.f32.mrb[0].mxu0
        %v657 = vadd.f32 0.0, %v656
        %v658 = vpop.f32.mrb[0].mxu0
        %v659 = vadd.f32 0.0, %v658
        %v660 = vpop.f32.mrb[0].mxu0
        %v661 = vadd.f32 0.0, %v660
        %v662 = vpop.f32.mrb[0].mxu0
        %v663 = vadd.f32 0.0, %v662
        %664 = vdwg.mxu0
        %v665 = vmax.f32 %v637, 0.0
        %v666 = vmax.f32 %v641, 0.0
        %v667 = vmax.f32 %v647, 0.0
        %v668 = vmax.f32 %v651, 0.0
        %v669 = vmax.f32 %v657, 0.0
        %v670 = vmax.f32 %v661, 0.0
        %v671 = vxor.u32 %v639, 2147483648
        %v672 = vxor.u32 %v643, 2147483648
        %v673 = vxor.u32 %v649, 2147483648
        %v674 = vxor.u32 %v653, 2147483648
        %v675 = vxor.u32 %v659, 2147483648
        %v676 = vxor.u32 %v663, 2147483648
        %v677 = vmul.f32 %v671, 1.442695
        %v678 = vpow.pop %v677
        %v679 = vmul.f32 %v672, 1.442695
        %v680 = vpow.pop %v679
        %v681 = vmul.f32 %v673, 1.442695
        %v682 = vpow.pop %v681
        %v683 = vmul.f32 %v674, 1.442695
        %v684 = vpow.pop %v683
        %v685 = vmul.f32 %v675, 1.442695
        %v686 = vpow.pop %v685
        %v687 = vmul.f32 %v676, 1.442695
        %v688 = vpow.pop %v687
        %v689 = vadd.f32 %v678, 1.0
        %v690 = vadd.f32 %v680, 1.0
        %v691 = vadd.f32 %v682, 1.0
        %v692 = vadd.f32 %v684, 1.0
        %v693 = vadd.f32 %v686, 1.0
        %v694 = vadd.f32 %v688, 1.0
        %v695 = vrcp.pop %v689
        %v696 = vmul.f32 1.0, %v695
        %v697 = vrcp.pop %v690
        %v698 = vmul.f32 1.0, %v697
        %v699 = vrcp.pop %v691
        %v700 = vmul.f32 1.0, %v699
        %v701 = vrcp.pop %v692
        %v702 = vmul.f32 1.0, %v701
        %v703 = vrcp.pop %v693
        %v704 = vmul.f32 1.0, %v703
        %v705 = vrcp.pop %v694
        %v706 = vmul.f32 1.0, %v705
        %v707 = vmul.f32 %v665, %v696
        %v708 = vmul.f32 %v666, %v698
        %v709 = vmul.f32 %v667, %v700
        %v710 = vmul.f32 %v668, %v702
        %v711 = vmul.f32 %v669, %v704
        %v712 = vmul.f32 %v670, %v706
        %v713 = vld [vmem:[%s4] sm:$0x1]
        %v715 = vlaneseq
        %v716 = vshrl.u32 %v715, 7
        %v717 = vsub.s32 0, %v716
        %v718 = vrot.slane %v713, %v717
        %v720 = vmul.f32 %v707, %v718
        %v721 = vmul.f32 %v708, %v718
        %v722 = vmul.f32 %v709, %v718
        %v723 = vmul.f32 %v710, %v718
        %v724 = vmul.f32 %v711, %v718
        %v725 = vmul.f32 %v712, %v718
        %726 = vadd.xlane.f32.xlu0 %v720
        %v727 = vpop.xlane.xlu0 %726
        %728 = vadd.xlane.f32.xlu0 %v721
        %v729 = vpop.xlane.xlu0 %728
        %730 = vadd.xlane.f32.xlu0 %v722
        %v731 = vpop.xlane.xlu0 %730
        %732 = vadd.xlane.f32.xlu0 %v723
        %v733 = vpop.xlane.xlu0 %732
        %734 = vadd.xlane.f32.xlu0 %v724
        %v735 = vpop.xlane.xlu0 %734
        %736 = vadd.xlane.f32.xlu0 %v725
        %v737 = vpop.xlane.xlu0 %736
        %v738 = vsel %vm479, %v727, -1e+30
        %v739 = vsel %vm480, %v729, -1e+30
        %v740 = vsel %vm481, %v731, -1e+30
        %v741 = vsel %vm482, %v733, -1e+30
        %v742 = vsel %vm483, %v735, -1e+30
        %v743 = vsel %vm484, %v737, -1e+30
        %v744 = vld [vmem:[#allocation2] sm:$0x1]
        %v745 = vmax.f32 %v738, %v742
        %v746 = vmax.f32 %v739, %v743
        %v747 = vmax.f32 %v745, %v746
        %v748 = vmax.f32 %v740, %v741
        %v749 = vmax.f32 %v747, %v748
        %v750 = vrot.slane %v749, 4
        %v751 = vmax.f32 %v749, %v750
        %v752 = vrot.slane %v751, 2
        %v753 = vmax.f32 %v751, %v752
        %v754 = vrot.slane %v753, 1
        %v755 = vmax.f32 %v753, %v754
        %v756 = vmax.f32 %v744, %v755
        %v757 = vsub.f32 %v744, %v756
        %v758 = vmul.f32 %v757, 1.442695
        %v759 = vpow.pop %v758
        %v761 = vlaneseq
        %v762 = vshrl.u32 %v761, 7
        %v763 = vsub.s32 0, %v762
        %v764 = vrot.slane %v756, %v763
        %v766 = vsub.f32 %v738, %v764
        %v767 = vsub.f32 %v739, %v764
        %v768 = vsub.f32 %v740, %v764
        %v769 = vsub.f32 %v741, %v764
        %v770 = vsub.f32 %v742, %v764
        %v771 = vsub.f32 %v743, %v764
        %v772 = vmul.f32 %v766, 1.442695
        %v773 = vpow.pop %v772
        %v774 = vmul.f32 %v767, 1.442695
        %v775 = vpow.pop %v774
        %v776 = vmul.f32 %v768, 1.442695
        %v777 = vpow.pop %v776
        %v778 = vmul.f32 %v769, 1.442695
        %v779 = vpow.pop %v778
        %v780 = vmul.f32 %v770, 1.442695
        %v781 = vpow.pop %v780
        %v782 = vmul.f32 %v771, 1.442695
        %v783 = vpow.pop %v782
        %v784 = vld [vmem:[#allocation3] sm:$0x1]
        %v785 = vmul.f32 %v759, %v784
        %vm786 = vcmask 7168
        %v787 = vsel %vm786, %v773, 0.0
        %v788 = vsel %vm786, %v775, 0.0
        %v789 = vadd.f32 %v787, %v788
        %v790 = vsel %vm786, %v777, 0.0
        %v791 = vadd.f32 %v789, %v790
        %v792 = vsel %vm786, %v779, 0.0
        %v793 = vadd.f32 %v791, %v792
        %v794 = vsel %vm786, %v781, 0.0
        %v795 = vadd.f32 %v793, %v794
        %v796 = vsel %vm786, %v783, 0.0
        %v797 = vadd.f32 %v795, %v796
        %v798 = vrot.slane %v797, 4
        %v799 = vadd.f32 %v797, %v798
        %v800 = vrot.slane %v799, 2
        %v801 = vadd.f32 %v799, %v800
        %v802 = vrot.slane %v801, 1
        %v803 = vadd.f32 %v801, %v802
        %v804 = vadd.f32 %v785, %v803
        %vm805 = vcmask 0
        %806 = vst.msk [vmem:[#allocation3] sm:$0x1] %vm805, %v804
        %v807 = vld [vmem:[#allocation4] sm:$0x1]
        %809 = vset.pattern.permute.xlu0 0
        %810 = vperm.xlu0 %809, %v759
        %v811 = vpop.permute.xlu0 %810
        %v813 = vlaneseq
        %v814 = vshrl.u32 %v813, 7
        %v815 = vsub.s32 0, %v814
        %v816 = vrot.slane %v811, %v815
        %v817 = vmul.f32 %v816, %v807
        %819 = vset.pattern.permute.xlu0 0
        %820 = vperm.xlu0 %819, %v773
        %v821 = vpop.permute.xlu0 %820
        %824 = vset.pattern.permute.xlu0 0
        %825 = vperm.xlu0 %824, %v775
        %v826 = vpop.permute.xlu0 %825
        %829 = vset.pattern.permute.xlu0 0
        %830 = vperm.xlu0 %829, %v777
        %v831 = vpop.permute.xlu0 %830
        %834 = vset.pattern.permute.xlu0 0
        %835 = vperm.xlu0 %834, %v779
        %v836 = vpop.permute.xlu0 %835
        %839 = vset.pattern.permute.xlu0 0
        %840 = vperm.xlu0 %839, %v781
        %v841 = vpop.permute.xlu0 %840
        %844 = vset.pattern.permute.xlu0 0
        %845 = vperm.xlu0 %844, %v783
        %v846 = vpop.permute.xlu0 %845
        %v848 = vmul.f32 %v821, %v497
        %v849 = vmul.f32 %v826, %v498
        %v850 = vmul.f32 %v831, %v499
        %v851 = vmul.f32 %v836, %v500
        %v852 = vmul.f32 %v841, %v501
        %v853 = vmul.f32 %v846, %v502
        %v854 = vadd.f32 %v848, %v849
        %v855 = vadd.f32 %v854, %v850
        %v856 = vadd.f32 %v855, %v851
        %v857 = vadd.f32 %v856, %v852
        %v858 = vadd.f32 %v857, %v853
        %v859 = vrot.slane %v858, 4
        %v860 = vadd.f32 %v858, %v859
        %v861 = vrot.slane %v860, 2
        %v862 = vadd.f32 %v860, %v861
        %v863 = vrot.slane %v862, 1
        %v864 = vadd.f32 %v862, %v863
        %v865 = vadd.f32 %v817, %v864
        %866 = vst [vmem:[#allocation4] sm:$0x1] %v865
        %867 = vst.msk [vmem:[#allocation2] sm:$0x1] %vm805, %v756
        // Predicated region
        $region61: #{tpu_custom_call.1} parent=47 // pred_check
          %p868 = pneg %p335
        $region62: #{tpu_custom_call.1} parent=47 // pred_check_branch
          %870 = sbr.rel (%p868) target = $region64
        $region63: #{tpu_custom_call.1} parent=47 // pred_region
          %v871 = vld [vmem:[#allocation4] sm:$0x1]
          %v872 = vld [vmem:[#allocation3] sm:$0x1]
          %874 = vset.pattern.permute.xlu0 0
          %875 = vperm.xlu0 %874, %v872
          %v876 = vpop.permute.xlu0 %875
          %v878 = vlaneseq
          %v879 = vshrl.u32 %v878, 7
          %v880 = vsub.s32 0, %v879
          %v881 = vrot.slane %v876, %v880
          %v882 = vrcp.pop %v881
          %v883 = vmul.f32 %v871, %v882
          %v884 = vld [vmem:[%s5] sm:$0xff]
          %v885 = vld [vmem:[%s5 + $0x8] sm:$0xff]
          %v886 = vld [vmem:[%s5 + $0x10] sm:$0xff]
          %v887 = vld [vmem:[%s5 + $0x18] sm:$0xff]
          %v888 = vld [vmem:[%s5 + $0x20] sm:$0xff]
          %v889 = vld [vmem:[%s5 + $0x28] sm:$0xff]
          %v890 = vld [vmem:[%s5 + $0x30] sm:$0xff]
          %v891 = vld [vmem:[%s5 + $0x38] sm:$0xff]
          %v892 = vld [vmem:[%s5 + $0x40] sm:$0xff]
          %v893 = vld [vmem:[%s5 + $0x48] sm:$0xff]
          %v894 = vld [vmem:[%s5 + $0x50] sm:$0xff]
          %v895 = vld [vmem:[%s5 + $0x58] sm:$0xff]
          %v896 = vld [vmem:[%s5 + $0x60] sm:$0xff]
          %v897 = vld [vmem:[%s5 + $0x68] sm:$0xff]
          %v898 = vld [vmem:[%s5 + $0x70] sm:$0xff]
          %v899 = vld [vmem:[%s5 + $0x78] sm:$0xff]
          %v900 = vld [vmem:[%s6] sm:$0x1]
          %901 = vmatprep.subr.mxu0 0.0
          %902 = vmatpush1.msra.mxu0 %v884
          %903 = vmatprep.subr.mxu0 0.0
          %904 = vmatpush1.msra.mxu0 %v885
          %905 = vmatprep.subr.mxu0 0.0
          %906 = vmatpush1.msra.mxu0 %v886
          %907 = vmatprep.subr.mxu0 0.0
          %908 = vmatpush1.msra.mxu0 %v887
          %909 = vmatprep.subr.mxu0 0.0
          %910 = vmatpush1.msra.mxu0 %v888
          %911 = vmatprep.subr.mxu0 0.0
          %912 = vmatpush1.msra.mxu0 %v889
          %913 = vmatprep.subr.mxu0 0.0
          %914 = vmatpush1.msra.mxu0 %v890
          %915 = vmatprep.subr.mxu0 0.0
          %916 = vmatpush1.msra.mxu0 %v891
          %917 = vmatprep.subr.mxu0 0.0
          %918 = vmatpush1.msra.mxu0 %v892
          %919 = vmatprep.subr.mxu0 0.0
          %920 = vmatpush1.msra.mxu0 %v893
          %921 = vmatprep.subr.mxu0 0.0
          %922 = vmatpush1.msra.mxu0 %v894
          %923 = vmatprep.subr.mxu0 0.0
          %924 = vmatpush1.msra.mxu0 %v895
          %925 = vmatprep.subr.mxu0 0.0
          %926 = vmatpush1.msra.mxu0 %v896
          %927 = vmatprep.subr.mxu0 0.0
          %928 = vmatpush1.msra.mxu0 %v897
          %929 = vmatprep.subr.mxu0 0.0
          %930 = vmatpush1.msra.mxu0 %v898
          %931 = vmatprep.subr.mxu0 0.0
          %932 = vmatpush1.msra.mxu0 %v899
          %933 = vmatprep.subr.mxu0 0.0
          %934 = vmatpush1.msra.mxu0 0.0
          %935 = vmatprep.subr.mxu0 0.0
          %936 = vmatpush1.msra.mxu0 0.0
          %937 = vmatprep.subr.mxu0 0.0
          %938 = vmatpush1.msra.mxu0 0.0
          %939 = vmatprep.subr.mxu0 0.0
          %940 = vmatpush1.msra.mxu0 0.0
          %941 = vmatprep.subr.mxu0 0.0
          %942 = vmatpush1.msra.mxu0 0.0
          %943 = vmatprep.subr.mxu0 0.0
          %944 = vmatpush1.msra.mxu0 0.0
          %945 = vmatprep.subr.mxu0 0.0
          %946 = vmatpush1.msra.mxu0 0.0
          %947 = vmatprep.subr.mxu0 0.0
          %948 = vmatpush1.msra.mxu0 0.0
          %949 = vmatprep.subr.mxu0 0.0
          %950 = vmatpush1.msra.mxu0 0.0
          %951 = vmatprep.subr.mxu0 0.0
          %952 = vmatpush1.msra.mxu0 0.0
          %953 = vmatprep.subr.mxu0 0.0
          %954 = vmatpush1.msra.mxu0 0.0
          %955 = vmatprep.subr.mxu0 0.0
          %956 = vmatpush1.msra.mxu0 0.0
          %957 = vmatprep.subr.mxu0 0.0
          %958 = vmatpush1.msra.mxu0 0.0
          %959 = vmatprep.subr.mxu0 0.0
          %960 = vmatpush1.msra.mxu0 0.0
          %961 = vmatprep.subr.mxu0 0.0
          %962 = vmatpush1.msra.mxu0 0.0
          %963 = vmatprep.subr.mxu0 0.0
          %964 = vmatpush1.msra.mxu0 0.0
          %965 = vmatprep.mubr.f32.mxu0 0.0
          %966 = vmatmul.mubr.f32.gmra.mrb[0].mxu0 %v883
          %v967 = vpop.f32.mrb[0].mxu0
          %v968 = vadd.f32 %v900, %v967
          %v969 = vpop.f32.mrb[0].mxu0
          %970 = vdwg.mxu0
          %vm971 = vcmask 8192
          %972 = vst.msk [vmem:[%s330] sm:$0x1] %vm971, %v968
        $region64: #{tpu_custom_call.1} parent=47 // pred_fallthru
          _
        %s973 = sand.u32 %s199, 1
        %s974 = scalar_lea.sflag [#allocation7], %s973
        %s975 = sand.u32 %s199, 1
        %s976 = scalar_lea.vmem [#allocation10], %s975
        // Predicated region
        $region65: #{tpu_custom_call.1} parent=47 // pred_check
          %p977 = pneg %p209
        $region66: #{tpu_custom_call.1} parent=47 // pred_check_branch
          %979 = sbr.rel (%p977) target = $region68
        $region67: #{tpu_custom_call.1} parent=47 // pred_region
          %s981 = ssub.s32 16, 16
          %982 = vsyncadd %s974, %s981
          %s983 = smul.addr %s29, 16
          %s984 = scalar_lea.hbm %s7, %s983
          %s986 = sshll.u32 %s976, 4
          %s987 = int_to_ptr.vmem [resolvable:$true] %s986
          %989 = dma.vmem_to_hbm [thread:$0]  %s987, 16, %s984, %s974
        $region68: #{tpu_custom_call.1} parent=47 // pred_fallthru
          _
      $region48: #{tpu_custom_call.1} parent=5 // pred_fallthru
        _
      %p990 = scmp.le.s32.totalorder 2, %s20
      // Predicated region
      $region69: #{tpu_custom_call.1} parent=5 // pred_check
        %p991 = pneg %p990
      $region70: #{tpu_custom_call.1} parent=5 // pred_check_branch
        %993 = sbr.rel (%p991) target = $region72
      $region71: #{tpu_custom_call.1} parent=5 // pred_region
        %s994 = ssub.s32 %s20, 2
        // Predicated region
        $region73: #{tpu_custom_call.1} parent=71 // pred_check
          %p995 = pneg %p215
        $region74: #{tpu_custom_call.1} parent=71 // pred_check_branch
          %997 = sbr.rel (%p995) target = $region76
        $region75: #{tpu_custom_call.1} parent=71 // pred_region
          %s998 = sand.u32 %s200, 1
          %s999 = scalar_lea.sflag [#allocation7], %s998
          %s1000 = sand.u32 %s200, 1
          %s1001 = scalar_lea.vmem [#allocation10], %s1000
          %1002 = dma.done %s999, 16
        $region76: #{tpu_custom_call.1} parent=71 // pred_fallthru
          _
      $region72: #{tpu_custom_call.1} parent=5 // pred_fallthru
        _
    $region6: #{tpu_custom_call.1} parent=1 // loop_footer
      %s24 = sadd.s32 1, %s20
    $region7: #{tpu_custom_call.1} parent=1 // loop_footer_branch
      %19 = sbr.rel target = $region3
    $region8: #{tpu_custom_call.1} parent=1 // loop_exit
      _
    %1003 = vsyncpa [#allocation6], 1
    %s1004 = scalar_lea.sflag [#allocation6], 1
    %1005 = vsyncpa %s1004, 1
    %1006 = vsyncpa [#allocation9], 1
    %1007 = vsyncpa [#allocation7], 1
    %s1008 = scalar_lea.sflag [#allocation7], 1
    %1009 = vsyncpa %s1008, 1

// kernel: tpu_custom_call.1
$region0: #{tpu_custom_call.1}
  #allocation0 [shape = 'u32[]', space=smem, size = 0x4, offset = 0x4, fixed_abs, tag = 'smem constant byte address 0x4 - core index']
  #allocation1 [shape = 'u32[144,128]{1,0:T(1,128)}', space=vmem, size = 0x12000, scoped, tag = 'internal scratch']
  #allocation2 [shape = 'f32[1,1]{1,0:T(1,128)}', space=vmem, size = 0x200, scoped, tag = 'scratch operand']
  #allocation3 [shape = 'f32[1,1]{1,0:T(1,128)}', space=vmem, size = 0x200, scoped, tag = 'scratch operand']
  #allocation4 [shape = 'f32[1,128]{1,0:T(1,128)}', space=vmem, size = 0x200, scoped, tag = 'scratch operand']
  %s0 = inlined_call_operand.hbm [shape: f32[2,40,64], index: 0, kind: input, shape index: {}]
  %s1 = inlined_call_operand.hbm [shape: bf16[64,128], index: 1, kind: input, shape index: {}]
  %s2 = inlined_call_operand.vmem [shape: f32[1,128], index: 2, kind: input, shape index: {}]
  %s3 = inlined_call_operand.vmem [shape: bf16[128,256], index: 3, kind: input, shape index: {}]
  %s4 = inlined_call_operand.vmem [shape: f32[1,128], index: 4, kind: input, shape index: {}]
  %s5 = inlined_call_operand.vmem [shape: f32[128,2], index: 5, kind: input, shape index: {}]
  %s6 = inlined_call_operand.vmem [shape: f32[1,2], index: 6, kind: input, shape index: {}]
  %s7 = inlined_call_operand.hbm [shape: f32[2,1,2], index: 7, kind: output, shape index: {}]
  %s8 = sld [smem:[#allocation0]]
  $region77: #{tpu_custom_call.1} parent=0
    _
  %s10 = ssub.s32 1, %s8
  %s11 = scalar_select 0, %s10, %s8
  $region1: #{tpu_custom_call.1} parent=0
    #allocation5 [shape = 'u8[49152]{0}', space=vmem, size = 0xc000, scoped, tag = 'input window, operand 0']
    #allocation6 [shape = 's32[2]{0}', space=sflag, size = 0x8, scoped, tag = 'scoped memory for tpu_custom_call.1']
    #allocation7 [shape = 's32[2]{0}', space=sflag, size = 0x8, scoped, tag = 'scoped memory for tpu_custom_call.1']
    #allocation8 [shape = 'u8[16384]{0}', space=vmem, size = 0x4000, scoped, tag = 'input window, operand 1, single buffered']
    #allocation9 [shape = 's32[1]{0}', space=sflag, size = 0x4, scoped, tag = 'scoped memory for tpu_custom_call.1']
    #allocation10 [shape = 'u8[1024]{0}', space=vmem, size = 0x400, scoped, tag = 'output window, operand 0']
    %12 = vsyncpa [#allocation6], 0
    %s13 = scalar_lea.sflag [#allocation6], 1
    %14 = vsyncpa %s13, 0
    %15 = vsyncpa [#allocation9], 0
    %16 = vsyncpa [#allocation7], 0
    %s17 = scalar_lea.sflag [#allocation7], 1
    %18 = vsyncpa %s17, 0
    loop: start=0, step=1, limit=4
    $region2: #{tpu_custom_call.1} parent=1 // loop_pre_header
      _
    $region3: #{tpu_custom_call.1} parent=1 // loop_header
      %s20 = sphi 0, %s24
      %p21 = scmp.ge.s32.totalorder %s20, 4
      %s27 = sphi 0, %s39
      %s28 = sphi 0, %s35
      %s29 = sphi 0, %s27
      %s30 = sphi 0, %s28
      %s31 = sphi 0, %s29
      %s32 = sphi 0, %s30
      %s44 = sphi 0, %s46
      %s47 = sphi 0, %s44
      %s48 = sphi 0, %s47
      %s64 = sphi 0, %s48
      %s68 = sphi 0, %s68
      %s70 = sphi 0, %s68
      %s71 = sphi 0, %s70
      %s85 = sphi 0, %s71
      %s89 = sphi 0, %s89
      %s91 = sphi 0, %s89
      %s92 = sphi 0, %s91
      %s106 = sphi 0, %s92
      %s110 = sphi 0, %s110
      %s112 = sphi 0, %s110
      %s113 = sphi 0, %s112
      %s127 = sphi 0, %s113
      %s131 = sphi 0, %s131
      %s133 = sphi 0, %s131
      %s134 = sphi 0, %s133
      %s148 = sphi 0, %s134
      %s152 = sphi 0, %s152
      %s154 = sphi 0, %s152
      %s155 = sphi 0, %s154
      %s169 = sphi 0, %s155
      %s173 = sphi 0, %s173
      %s175 = sphi 0, %s173
      %s176 = sphi 0, %s175
      %s190 = sphi 0, %s176
      %s196 = sphi 0, %s198
      %s199 = sphi 0, %s196
      %s200 = sphi 0, %s199
      %s216 = sphi 0, %s200
    $region4: #{tpu_custom_call.1} parent=1 // loop_header_branch
      %23 = sbr.rel (%p21) target = $region8
    $region5: #{tpu_custom_call.1} parent=1 // loop_body
      %s25 = ssub.s32 %s20, 1
      %s26 = ssub.s32 %s20, 2
      %s33 = sadd.s32 1, %s28
      %p34 = scmp.ge.s32.totalorder %s33, 1
      %s35 = scalar_select %p34, 0, %s33
      %s36 = sadd.s32 1, %s27
      %s37 = scalar_select %p34, %s36, %s27
      %p38 = scmp.ge.s32.totalorder %s37, 2
      %s39 = scalar_select %p38, 0, %s37
      %s40 = ssub.s32 %s27, %s39
      %s41 = ssub.s32 %s28, %s35
      %s42 = sor.u32 %s40, %s41
      %p43 = scmp.eq.s32.totalorder %s42, 0
      %s45 = sadd.s32 %s44, 1
      %s46 = scalar_select %p43, %s44, %s45
      %p49 = pneg %p43
      %p50 = scmp.eq.s32.totalorder %s20, 1
      %p51 = por %p49, %p50
      %p52 = scmp.ne.s32.totalorder %s44, %s47
      %p53 = scmp.eq.s32.totalorder %s20, 0
      %p54 = por %p52, %p53
      %p55 = scmp.ne.s32.totalorder %s44, %s47
      %p56 = scmp.eq.s32.totalorder %s25, 1
      %p57 = por %p55, %p56
      %p58 = scmp.ne.s32.totalorder %s47, %s48
      %p59 = scmp.eq.s32.totalorder %s25, 0
      %p60 = por %p58, %p59
      %p61 = scmp.ne.s32.totalorder %s47, %s48
      %p62 = scmp.eq.s32.totalorder %s26, 1
      %p63 = por %p61, %p62
      %p65 = scmp.ne.s32.totalorder %s48, %s64
      %p66 = scmp.eq.s32.totalorder %s26, 0
      %p67 = por %p65, %p66
      %s69 = sadd.s32 %s68, 1
      %p72 = scmp.eq.s32.totalorder %s20, 1
      %p73 = scmp.ne.s32.totalorder %s68, %s70
      %p74 = scmp.eq.s32.totalorder %s20, 0
      %p75 = por %p73, %p74
      %p76 = scmp.ne.s32.totalorder %s68, %s70
      %p77 = scmp.eq.s32.totalorder %s25, 1
      %p78 = por %p76, %p77
      %p79 = scmp.ne.s32.totalorder %s70, %s71
      %p80 = scmp.eq.s32.totalorder %s25, 0
      %p81 = por %p79, %p80
      %p82 = scmp.ne.s32.totalorder %s70, %s71
      %p83 = scmp.eq.s32.totalorder %s26, 1
      %p84 = por %p82, %p83
      %p86 = scmp.ne.s32.totalorder %s71, %s85
      %p87 = scmp.eq.s32.totalorder %s26, 0
      %p88 = por %p86, %p87
      %s90 = sadd.s32 %s89, 1
      %p93 = scmp.eq.s32.totalorder %s20, 1
      %p94 = scmp.ne.s32.totalorder %s89, %s91
      %p95 = scmp.eq.s32.totalorder %s20, 0
      %p96 = por %p94, %p95
      %p97 = scmp.ne.s32.totalorder %s89, %s91
      %p98 = scmp.eq.s32.totalorder %s25, 1
      %p99 = por %p97, %p98
      %p100 = scmp.ne.s32.totalorder %s91, %s92
      %p101 = scmp.eq.s32.totalorder %s25, 0
      %p102 = por %p100, %p101
      %p103 = scmp.ne.s32.totalorder %s91, %s92
      %p104 = scmp.eq.s32.totalorder %s26, 1
      %p105 = por %p103, %p104
      %p107 = scmp.ne.s32.totalorder %s92, %s106
      %p108 = scmp.eq.s32.totalorder %s26, 0
      %p109 = por %p107, %p108
      %s111 = sadd.s32 %s110, 1
      %p114 = scmp.eq.s32.totalorder %s20, 1
      %p115 = scmp.ne.s32.totalorder %s110, %s112
      %p116 = scmp.eq.s32.totalorder %s20, 0
      %p117 = por %p115, %p116
      %p118 = scmp.ne.s32.totalorder %s110, %s112
      %p119 = scmp.eq.s32.totalorder %s25, 1
      %p120 = por %p118, %p119
      %p121 = scmp.ne.s32.totalorder %s112, %s113
      %p122 = scmp.eq.s32.totalorder %s25, 0
      %p123 = por %p121, %p122
      %p124 = scmp.ne.s32.totalorder %s112, %s113
      %p125 = scmp.eq.s32.totalorder %s26, 1
      %p126 = por %p124, %p125
      %p128 = scmp.ne.s32.totalorder %s113, %s127
      %p129 = scmp.eq.s32.totalorder %s26, 0
      %p130 = por %p128, %p129
      %s132 = sadd.s32 %s131, 1
      %p135 = scmp.eq.s32.totalorder %s20, 1
      %p136 = scmp.ne.s32.totalorder %s131, %s133
      %p137 = scmp.eq.s32.totalorder %s20, 0
      %p138 = por %p136, %p137
      %p139 = scmp.ne.s32.totalorder %s131, %s133
      %p140 = scmp.eq.s32.totalorder %s25, 1
      %p141 = por %p139, %p140
      %p142 = scmp.ne.s32.totalorder %s133, %s134
      %p143 = scmp.eq.s32.totalorder %s25, 0
      %p144 = por %p142, %p143
      %p145 = scmp.ne.s32.totalorder %s133, %s134
      %p146 = scmp.eq.s32.totalorder %s26, 1
      %p147 = por %p145, %p146
      %p149 = scmp.ne.s32.totalorder %s134, %s148
      %p150 = scmp.eq.s32.totalorder %s26, 0
      %p151 = por %p149, %p150
      %s153 = sadd.s32 %s152, 1
      %p156 = scmp.eq.s32.totalorder %s20, 1
      %p157 = scmp.ne.s32.totalorder %s152, %s154
      %p158 = scmp.eq.s32.totalorder %s20, 0
      %p159 = por %p157, %p158
      %p160 = scmp.ne.s32.totalorder %s152, %s154
      %p161 = scmp.eq.s32.totalorder %s25, 1
      %p162 = por %p160, %p161
      %p163 = scmp.ne.s32.totalorder %s154, %s155
      %p164 = scmp.eq.s32.totalorder %s25, 0
      %p165 = por %p163, %p164
      %p166 = scmp.ne.s32.totalorder %s154, %s155
      %p167 = scmp.eq.s32.totalorder %s26, 1
      %p168 = por %p166, %p167
      %p170 = scmp.ne.s32.totalorder %s155, %s169
      %p171 = scmp.eq.s32.totalorder %s26, 0
      %p172 = por %p170, %p171
      %s174 = sadd.s32 %s173, 1
      %p177 = scmp.eq.s32.totalorder %s20, 1
      %p178 = scmp.ne.s32.totalorder %s173, %s175
      %p179 = scmp.eq.s32.totalorder %s20, 0
      %p180 = por %p178, %p179
      %p181 = scmp.ne.s32.totalorder %s173, %s175
      %p182 = scmp.eq.s32.totalorder %s25, 1
      %p183 = por %p181, %p182
      %p184 = scmp.ne.s32.totalorder %s175, %s176
      %p185 = scmp.eq.s32.totalorder %s25, 0
      %p186 = por %p184, %p185
      %p187 = scmp.ne.s32.totalorder %s175, %s176
      %p188 = scmp.eq.s32.totalorder %s26, 1
      %p189 = por %p187, %p188
      %p191 = scmp.ne.s32.totalorder %s176, %s190
      %p192 = scmp.eq.s32.totalorder %s26, 0
      %p193 = por %p191, %p192
      %s194 = ssub.s32 %s27, %s39
      %p195 = scmp.eq.s32.totalorder %s194, 0
      %s197 = sadd.s32 %s196, 1
      %s198 = scalar_select %p195, %s196, %s197
      %p201 = pneg %p195
      %p202 = scmp.eq.s32.totalorder %s20, 1
      %p203 = por %p201, %p202
      %p204 = scmp.ne.s32.totalorder %s196, %s199
      %p205 = scmp.eq.s32.totalorder %s20, 0
      %p206 = por %p204, %p205
      %p207 = scmp.ne.s32.totalorder %s196, %s199
      %p208 = scmp.eq.s32.totalorder %s25, 1
      %p209 = por %p207, %p208
      %p210 = scmp.ne.s32.totalorder %s199, %s200
      %p211 = scmp.eq.s32.totalorder %s25, 0
      %p212 = por %p210, %p211
      %p213 = scmp.ne.s32.totalorder %s199, %s200
      %p214 = scmp.eq.s32.totalorder %s26, 1
      %p215 = por %p213, %p214
      %p217 = scmp.ne.s32.totalorder %s200, %s216
      %p218 = scmp.eq.s32.totalorder %s26, 0
      %p219 = por %p217, %p218
      %p220 = scmp.le.s32.totalorder 1, %s20
      %p221 = scmp.lt.s32.totalorder %s20, 3
      %p222 = pnand %p220, %p221
      %p223 = pneg %p222
      // Predicated region
      $region9: #{tpu_custom_call.1} parent=5 // pred_check
        _
      $region10: #{tpu_custom_call.1} parent=5 // pred_check_branch
        %225 = sbr.rel (%p222) target = $region12
      $region11: #{tpu_custom_call.1} parent=5 // pred_region
        %s226 = ssub.s32 %s20, 1
        // Predicated region
        $region13: #{tpu_custom_call.1} parent=11 // pred_check
          %p227 = pneg %p81
        $region14: #{tpu_custom_call.1} parent=11 // pred_check_branch
          %229 = sbr.rel (%p227) target = $region16
        $region15: #{tpu_custom_call.1} parent=11 // pred_region
          %s231 = ssub.s32 512, 512
          %232 = vsyncadd [#allocation9], %s231
          %s233 = sshll.u32 [#allocation8], 4
          %s234 = int_to_ptr.vmem [resolvable:$true] %s233
          %239 = dma.hbm_to_vmem [thread:$0]  %s1, 512, %s234, [#allocation9], 64, 64, 4
        $region16: #{tpu_custom_call.1} parent=11 // pred_fallthru
          _
        // Predicated region
        $region17: #{tpu_custom_call.1} parent=11 // pred_check
          %p240 = pneg %p102
        $region18: #{tpu_custom_call.1} parent=11 // pred_check_branch
          %242 = sbr.rel (%p240) target = $region20
        $region19: #{tpu_custom_call.1} parent=11 // pred_region
          _
        $region20: #{tpu_custom_call.1} parent=11 // pred_fallthru
          _
        // Predicated region
        $region21: #{tpu_custom_call.1} parent=11 // pred_check
          %p243 = pneg %p123
        $region22: #{tpu_custom_call.1} parent=11 // pred_check_branch
          %245 = sbr.rel (%p243) target = $region24
        $region23: #{tpu_custom_call.1} parent=11 // pred_region
          _
        $region24: #{tpu_custom_call.1} parent=11 // pred_fallthru
          _
        // Predicated region
        $region25: #{tpu_custom_call.1} parent=11 // pred_check
          %p246 = pneg %p144
        $region26: #{tpu_custom_call.1} parent=11 // pred_check_branch
          %248 = sbr.rel (%p246) target = $region28
        $region27: #{tpu_custom_call.1} parent=11 // pred_region
          _
        $region28: #{tpu_custom_call.1} parent=11 // pred_fallthru
          _
        // Predicated region
        $region29: #{tpu_custom_call.1} parent=11 // pred_check
          %p249 = pneg %p165
        $region30: #{tpu_custom_call.1} parent=11 // pred_check_branch
          %251 = sbr.rel (%p249) target = $region32
        $region31: #{tpu_custom_call.1} parent=11 // pred_region
          _
        $region32: #{tpu_custom_call.1} parent=11 // pred_fallthru
          _
        // Predicated region
        $region33: #{tpu_custom_call.1} parent=11 // pred_check
          %p252 = pneg %p186
        $region34: #{tpu_custom_call.1} parent=11 // pred_check_branch
          %254 = sbr.rel (%p252) target = $region36
        $region35: #{tpu_custom_call.1} parent=11 // pred_region
          _
        $region36: #{tpu_custom_call.1} parent=11 // pred_fallthru
          _
      $region12: #{tpu_custom_call.1} parent=5 // pred_fallthru
        _
      %p255 = scmp.lt.s32.totalorder %s20, 2
      // Predicated region
      $region37: #{tpu_custom_call.1} parent=5 // pred_check
        %p256 = pneg %p255
      $region38: #{tpu_custom_call.1} parent=5 // pred_check_branch
        %258 = sbr.rel (%p256) target = $region40
      $region39: #{tpu_custom_call.1} parent=5 // pred_region
        // Predicated region
        $region41: #{tpu_custom_call.1} parent=39 // pred_check
          %p259 = pneg %p54
        $region42: #{tpu_custom_call.1} parent=39 // pred_check_branch
          %261 = sbr.rel (%p259) target = $region44
        $region43: #{tpu_custom_call.1} parent=39 // pred_region
          %s262 = sand.u32 %s44, 1
          %s263 = scalar_lea.sflag [#allocation6], %s262
          %s264 = sand.u32 %s44, 1
          %s265 = smul.addr %s264, 48
          %s266 = scalar_lea.vmem [#allocation5], %s265
          %s267 = smul.u32 6, %s28
          %s268 = ssub.s32 5, %s267
          %s269 = smul.u32 128, %s268
          %s271 = ssub.s32 768, %s269
          %272 = vsyncadd %s263, %s271
          %p273 = scmp.ne.s32.totalorder 0, %s269
          %s274 = smul.addr %s27, 5
          %s275 = sadd.s32 %s267, %s274
          %s276 = smul.addr %s275, 128
          %s277 = scalar_lea.hbm %s0, %s276
          %s278 = smul.u32 8, %s268
          %s279 = sshll.u32 %s266, 4
          %s280 = int_to_ptr.vmem [resolvable:$true] %s279
          %s281 = sshll.u32 %s278, 4
          %285 = dma.hbm_to_vmem [thread:$0]  (%p273), %s277, %s281, %s280, %s263, 128, 128, 8
        $region44: #{tpu_custom_call.1} parent=39 // pred_fallthru
          _
      $region40: #{tpu_custom_call.1} parent=5 // pred_fallthru
        _
      %p286 = scmp.le.s32.totalorder 1, %s20
      %p287 = scmp.lt.s32.totalorder %s20, 3
      %p288 = pnand %p286, %p287
      %p289 = pneg %p288
      // Predicated region
      $region45: #{tpu_custom_call.1} parent=5 // pred_check
        _
      $region46: #{tpu_custom_call.1} parent=5 // pred_check_branch
        %291 = sbr.rel (%p288) target = $region48
      $region47: #{tpu_custom_call.1} parent=5 // pred_region
        %s292 = ssub.s32 %s20, 1
        %s293 = sand.u32 %s47, 1
        %s294 = scalar_lea.sflag [#allocation6], %s293
        %s295 = sand.u32 %s47, 1
        %s296 = smul.addr %s295, 48
        %s297 = scalar_lea.vmem [#allocation5], %s296
        // Predicated region
        $region49: #{tpu_custom_call.1} parent=47 // pred_check
          %p298 = pneg %p60
        $region50: #{tpu_custom_call.1} parent=47 // pred_check_branch
          %300 = sbr.rel (%p298) target = $region52
        $region51: #{tpu_custom_call.1} parent=47 // pred_region
          %301 = dma.done %s294, 768
        $region52: #{tpu_custom_call.1} parent=47 // pred_fallthru
          _
        // Predicated region
        $region53: #{tpu_custom_call.1} parent=47 // pred_check
          %p302 = pneg %p81
        $region54: #{tpu_custom_call.1} parent=47 // pred_check_branch
          %304 = sbr.rel (%p302) target = $region56
        $region55: #{tpu_custom_call.1} parent=47 // pred_region
          %305 = dma.done [#allocation9], 512
        $region56: #{tpu_custom_call.1} parent=47 // pred_fallthru
          _
        %s306 = sand.u32 %s47, 1
        %s307 = scalar_lea.sflag [#allocation6], %s306
        %s308 = sand.u32 %s47, 1
        %s309 = smul.addr %s308, 48
        %s310 = scalar_lea.vmem [#allocation5], %s309
        %p311 = pneg %p60
        %p312 = pneg %p57
        %p313 = pneg %p81
        %p314 = pneg %p78
        %p315 = pneg %p102
        %p316 = pneg %p99
        %p317 = pneg %p123
        %p318 = pneg %p120
        %p319 = pneg %p144
        %p320 = pneg %p141
        %p321 = pneg %p165
        %p322 = pneg %p162
        %p323 = pneg %p186
        %p324 = pneg %p183
        %p325 = pneg %p212
        %p326 = pneg %p209
        %s327 = sand.u32 %s199, 1
        %s328 = scalar_lea.sflag [#allocation7], %s327
        %s329 = sand.u32 %s199, 1
        %s330 = scalar_lea.vmem [#allocation10], %s329
        %s331 = smul.u32 6, %s30
        %s332 = ssub.s32 5, %s331
        %s333 = smul.u32 128, %s332
        %p335 = scmp.eq.s32.totalorder %s30, 0
        // Predicated region
        $region57: #{tpu_custom_call.1} parent=47 // pred_check
          %p336 = pneg %p335
        $region58: #{tpu_custom_call.1} parent=47 // pred_check_branch
          %338 = sbr.rel (%p336) target = $region60
        $region59: #{tpu_custom_call.1} parent=47 // pred_region
          %vm339 = vcmask 0
          %340 = vst.msk [vmem:[#allocation2] sm:$0x1] %vm339, -1e+30
          %341 = vst.msk [vmem:[#allocation3] sm:$0x1] %vm339, 0.0
          %342 = vst [vmem:[#allocation4] sm:$0x1] 0.0
        $region60: #{tpu_custom_call.1} parent=47 // pred_fallthru
          _
        %v343 = vld [vmem:[%s297] sm:$0xff]
        %v344 = vld [vmem:[%s297 + $0x8] sm:$0xff]
        %v345 = vld [vmem:[%s297 + $0x10] sm:$0xff]
        %v346 = vld [vmem:[%s297 + $0x18] sm:$0xff]
        %v347 = vld [vmem:[%s297 + $0x20] sm:$0xff]
        %v348 = vld [vmem:[%s297 + $0x28] sm:$0xff]
        %v349 = vpack.c.bf16 %v344, %v343
        %v350 = vpack.c.bf16 %v346, %v345
        %v351 = vpack.c.bf16 %v348, %v347
        %v352 = vld [vmem:[#allocation8] sm:$0xf]
        %v353 = vld [vmem:[#allocation8 + $0x4] sm:$0xf]
        %v354 = vld [vmem:[#allocation8 + $0x8] sm:$0xf]
        %v355 = vld [vmem:[#allocation8 + $0xc] sm:$0xf]
        %v356 = vld [vmem:[#allocation8 + $0x10] sm:$0xf]
        %v357 = vld [vmem:[#allocation8 + $0x14] sm:$0xf]
        %v358 = vld [vmem:[#allocation8 + $0x18] sm:$0xf]
        %v359 = vld [vmem:[#allocation8 + $0x1c] sm:$0xf]
        %v360 = vld [vmem:[%s2] sm:$0x1]
        %v362 = vlaneseq
        %v363 = vshrl.u32 %v362, 7
        %v364 = vsub.s32 0, %v363
        %v365 = vrot.slane %v360, %v364
        %v375 = vunpack.c.l.b16 %v352
        %v376 = vunpack.c.l.b16 %v353
        %v377 = vunpack.c.l.b16 %v354
        %v378 = vunpack.c.l.b16 %v355
        %v379 = vunpack.c.l.b16 %v356
        %v380 = vunpack.c.l.b16 %v357
        %v381 = vunpack.c.l.b16 %v358
        %v382 = vunpack.c.l.b16 %v359
        %v383 = vpack.c.b16 %v376, %v375
        %v384 = vpack.c.b16 %v378, %v377
        %v385 = vpack.c.b16 %v380, %v379
        %v386 = vpack.c.b16 %v382, %v381
        %vm391 = vcmask 523264
        %v393 = vsel %vm391, %v349, 0
        %v396 = vsel %vm391, %v350, 0
        %v399 = vsel %vm391, %v351, 0
        %401 = vmatprep.subr.bf16.mxu0 0
        %402 = vmatpush1.bf16.msra.mxu0 %v383
        %403 = vmatprep.subr.bf16.mxu0 0
        %404 = vmatpush1.bf16.msra.mxu0 %v384
        %405 = vmatprep.subr.bf16.mxu0 0
        %406 = vmatpush1.bf16.msra.mxu0 %v385
        %407 = vmatprep.subr.bf16.mxu0 0
        %408 = vmatpush1.bf16.msra.mxu0 %v386
        %409 = vmatprep.subr.bf16.mxu0 0
        %410 = vmatpush1.bf16.msra.mxu0 0
        %411 = vmatprep.subr.bf16.mxu0 0
        %412 = vmatpush1.bf16.msra.mxu0 0
        %413 = vmatprep.subr.bf16.mxu0 0
        %414 = vmatpush1.bf16.msra.mxu0 0
        %415 = vmatprep.subr.bf16.mxu0 0
        %416 = vmatpush1.bf16.msra.mxu0 0
        %417 = vmatprep.subr.bf16.mxu0 0
        %418 = vmatpush1.bf16.msra.mxu0 0
        %419 = vmatprep.subr.bf16.mxu0 0
        %420 = vmatpush1.bf16.msra.mxu0 0
        %421 = vmatprep.subr.bf16.mxu0 0
        %422 = vmatpush1.bf16.msra.mxu0 0
        %423 = vmatprep.subr.bf16.mxu0 0
        %424 = vmatpush1.bf16.msra.mxu0 0
        %425 = vmatprep.subr.bf16.mxu0 0
        %426 = vmatpush1.bf16.msra.mxu0 0
        %427 = vmatprep.subr.bf16.mxu0 0
        %428 = vmatpush1.bf16.msra.mxu0 0
        %429 = vmatprep.subr.bf16.mxu0 0
        %430 = vmatpush1.bf16.msra.mxu0 0
        %431 = vmatprep.subr.bf16.mxu0 0
        %432 = vmatpush1.bf16.msra.mxu0 0
        %433 = vmatprep.mubr.bf16.mxu0 0
        %434 = vmatmul.mubr.bf16.gmra.mrb[0].mxu0 %v393
        %v435 = vpop.f32.mrb[0].mxu0
        %v436 = vadd.f32 %v365, %v435
        %v437 = vpop.f32.mrb[0].mxu0
        %v438 = vpop.f32.mrb[0].mxu0
        %v439 = vadd.f32 %v365, %v438
        %v440 = vpop.f32.mrb[0].mxu0
        %441 = vmatprep.mubr.bf16.mxu0 0
        %442 = vmatmul.mubr.bf16.gmra.mrb[0].mxu0 %v396
        %v443 = vpop.f32.mrb[0].mxu0
        %v444 = vadd.f32 %v365, %v443
        %v445 = vpop.f32.mrb[0].mxu0
        %v446 = vpop.f32.mrb[0].mxu0
        %v447 = vadd.f32 %v365, %v446
        %v448 = vpop.f32.mrb[0].mxu0
        %449 = vmatprep.mubr.bf16.mxu0 0
        %450 = vmatmul.mubr.bf16.gmra.mrb[0].mxu0 %v399
        %v451 = vpop.f32.mrb[0].mxu0
        %v452 = vadd.f32 %v365, %v451
        %v453 = vpop.f32.mrb[0].mxu0
        %v454 = vpop.f32.mrb[0].mxu0
        %v455 = vadd.f32 %v365, %v454
        %v456 = vpop.f32.mrb[0].mxu0
        %457 = vdwg.mxu0
        %v458 = vmax.f32 %v436, 0.0
        %v459 = vmax.f32 %v439, 0.0
        %v460 = vmax.f32 %v444, 0.0
        %v461 = vmax.f32 %v447, 0.0
        %v462 = vmax.f32 %v452, 0.0
        %v463 = vmax.f32 %v455, 0.0
        %v464 = vlaneseq
        %v465 = vshrl.u32 %v464, 7
        %v466 = vadd.s32 %v465, 8
        %v467 = vadd.s32 %v465, 16
        %v468 = vadd.s32 %v465, 24
        %v469 = vadd.s32 %v465, 32
        %v470 = vadd.s32 %v465, 40
        %s471 = smul.u32 %s30, 48
        %v472 = vstv %s471
        %v473 = vadd.s32 %v465, %v472
        %v474 = vadd.s32 %v466, %v472
        %v475 = vadd.s32 %v467, %v472
        %v476 = vadd.s32 %v468, %v472
        %v477 = vadd.s32 %v469, %v472
        %v478 = vadd.s32 %v470, %v472
        %vm479 = vcmp.lt.s32.totalorder %v473, 40
        %vm480 = vcmp.lt.s32.totalorder %v474, 40
        %vm481 = vcmp.lt.s32.totalorder %v475, 40
        %vm482 = vcmp.lt.s32.totalorder %v476, 40
        %vm483 = vcmp.lt.s32.totalorder %v477, 40
        %vm484 = vcmp.lt.s32.totalorder %v478, 40
        %v485 = vsel %vm479, 1, 0
        %v486 = vsel %vm480, 1, 0
        %v487 = vsel %vm481, 1, 0
        %v488 = vsel %vm482, 1, 0
        %v489 = vsel %vm483, 1, 0
        %v490 = vsel %vm484, 1, 0
        %vm491 = vcmp.eq.s32.totalorder %v485, 1
        %vm492 = vcmp.eq.s32.totalorder %v486, 1
        %vm493 = vcmp.eq.s32.totalorder %v487, 1
        %vm494 = vcmp.eq.s32.totalorder %v488, 1
        %vm495 = vcmp.eq.s32.totalorder %v489, 1
        %vm496 = vcmp.eq.s32.totalorder %v490, 1
        %v497 = vsel %vm491, %v458, 0.0
        %v498 = vsel %vm492, %v459, 0.0
        %v499 = vsel %vm493, %v460, 0.0
        %v500 = vsel %vm494, %v461, 0.0
        %v501 = vsel %vm495, %v462, 0.0
        %v502 = vsel %vm496, %v463, 0.0
        %v503 = vpack.c.bf16 %v498, %v497
        %v504 = vpack.c.bf16 %v500, %v499
        %v505 = vpack.c.bf16 %v502, %v501
        %v506 = vld [vmem:[%s3] sm:$0xff]
        %v507 = vld [vmem:[%s3 + $0x8] sm:$0xff]
        %v508 = vld [vmem:[%s3 + $0x10] sm:$0xff]
        %v509 = vld [vmem:[%s3 + $0x18] sm:$0xff]
        %v510 = vld [vmem:[%s3 + $0x20] sm:$0xff]
        %v511 = vld [vmem:[%s3 + $0x28] sm:$0xff]
        %v512 = vld [vmem:[%s3 + $0x30] sm:$0xff]
        %v513 = vld [vmem:[%s3 + $0x38] sm:$0xff]
        %v514 = vld [vmem:[%s3 + $0x40] sm:$0xff]
        %v515 = vld [vmem:[%s3 + $0x48] sm:$0xff]
        %v516 = vld [vmem:[%s3 + $0x50] sm:$0xff]
        %v517 = vld [vmem:[%s3 + $0x58] sm:$0xff]
        %v518 = vld [vmem:[%s3 + $0x60] sm:$0xff]
        %v519 = vld [vmem:[%s3 + $0x68] sm:$0xff]
        %v520 = vld [vmem:[%s3 + $0x70] sm:$0xff]
        %v521 = vld [vmem:[%s3 + $0x78] sm:$0xff]
        %v538 = vunpack.c.l.b16 %v506
        %v539 = vunpack.c.h.b16 %v506
        %v540 = vunpack.c.l.b16 %v507
        %v541 = vunpack.c.h.b16 %v507
        %v542 = vunpack.c.l.b16 %v508
        %v543 = vunpack.c.h.b16 %v508
        %v544 = vunpack.c.l.b16 %v509
        %v545 = vunpack.c.h.b16 %v509
        %v546 = vunpack.c.l.b16 %v510
        %v547 = vunpack.c.h.b16 %v510
        %v548 = vunpack.c.l.b16 %v511
        %v549 = vunpack.c.h.b16 %v511
        %v550 = vunpack.c.l.b16 %v512
        %v551 = vunpack.c.h.b16 %v512
        %v552 = vunpack.c.l.b16 %v513
        %v553 = vunpack.c.h.b16 %v513
        %v554 = vunpack.c.l.b16 %v514
        %v555 = vunpack.c.h.b16 %v514
        %v556 = vunpack.c.l.b16 %v515
        %v557 = vunpack.c.h.b16 %v515
        %v558 = vunpack.c.l.b16 %v516
        %v559 = vunpack.c.h.b16 %v516
        %v560 = vunpack.c.l.b16 %v517
        %v561 = vunpack.c.h.b16 %v517
        %v562 = vunpack.c.l.b16 %v518
        %v563 = vunpack.c.h.b16 %v518
        %v564 = vunpack.c.l.b16 %v519
        %v565 = vunpack.c.h.b16 %v519
        %v566 = vunpack.c.l.b16 %v520
        %v567 = vunpack.c.h.b16 %v520
        %v568 = vunpack.c.l.b16 %v521
        %v569 = vunpack.c.h.b16 %v521
        %v570 = vpack.c.b16 %v540, %v538
        %v571 = vpack.c.b16 %v541, %v539
        %v572 = vpack.c.b16 %v544, %v542
        %v573 = vpack.c.b16 %v545, %v543
        %v574 = vpack.c.b16 %v548, %v546
        %v575 = vpack.c.b16 %v549, %v547
        %v576 = vpack.c.b16 %v552, %v550
        %v577 = vpack.c.b16 %v553, %v551
        %v578 = vpack.c.b16 %v556, %v554
        %v579 = vpack.c.b16 %v557, %v555
        %v580 = vpack.c.b16 %v560, %v558
        %v581 = vpack.c.b16 %v561, %v559
        %v582 = vpack.c.b16 %v564, %v562
        %v583 = vpack.c.b16 %v565, %v563
        %v584 = vpack.c.b16 %v568, %v566
        %v585 = vpack.c.b16 %v569, %v567
        %602 = vmatprep.subr.bf16.mxu0 %v571
        %603 = vmatpush1.bf16.msra.mxu0 %v570
        %604 = vmatprep.subr.bf16.mxu0 %v573
        %605 = vmatpush1.bf16.msra.mxu0 %v572
        %606 = vmatprep.subr.bf16.mxu0 %v575
        %607 = vmatpush1.bf16.msra.mxu0 %v574
        %608 = vmatprep.subr.bf16.mxu0 %v577
        %609 = vmatpush1.bf16.msra.mxu0 %v576
        %610 = vmatprep.subr.bf16.mxu0 %v579
        %611 = vmatpush1.bf16.msra.mxu0 %v578
        %612 = vmatprep.subr.bf16.mxu0 %v581
        %613 = vmatpush1.bf16.msra.mxu0 %v580
        %614 = vmatprep.subr.bf16.mxu0 %v583
        %615 = vmatpush1.bf16.msra.mxu0 %v582
        %616 = vmatprep.subr.bf16.mxu0 %v585
        %617 = vmatpush1.bf16.msra.mxu0 %v584
        %618 = vmatprep.subr.bf16.mxu0 0
        %619 = vmatpush1.bf16.msra.mxu0 0
        %620 = vmatprep.subr.bf16.mxu0 0
        %621 = vmatpush1.bf16.msra.mxu0 0
        %622 = vmatprep.subr.bf16.mxu0 0
        %623 = vmatpush1.bf16.msra.mxu0 0
        %624 = vmatprep.subr.bf16.mxu0 0
        %625 = vmatpush1.bf16.msra.mxu0 0
        %626 = vmatprep.subr.bf16.mxu0 0
        %627 = vmatpush1.bf16.msra.mxu0 0
        %628 = vmatprep.subr.bf16.mxu0 0
        %629 = vmatpush1.bf16.msra.mxu0 0
        %630 = vmatprep.subr.bf16.mxu0 0
        %631 = vmatpush1.bf16.msra.mxu0 0
        %632 = vmatprep.subr.bf16.mxu0 0
        %633 = vmatpush1.bf16.msra.mxu0 0
        %634 = vmatprep.mubr.bf16.mxu0 0
        %635 = vmatmul.mubr.bf16.gmra.mrb[0].mxu0 %v503
        %v636 = vpop.f32.mrb[0].mxu0
        %v637 = vadd.f32 0.0, %v636
        %v638 = vpop.f32.mrb[0].mxu0
        %v639 = vadd.f32 0.0, %v638
        %v640 = vpop.f32.mrb[0].mxu0
        %v641 = vadd.f32 0.0, %v640
        %v642 = vpop.f32.mrb[0].mxu0
        %v643 = vadd.f32 0.0, %v642
        %644 = vmatprep.mubr.bf16.mxu0 0
        %645 = vmatmul.mubr.bf16.gmra.mrb[0].mxu0 %v504
        %v646 = vpop.f32.mrb[0].mxu0
        %v647 = vadd.f32 0.0, %v646
        %v648 = vpop.f32.mrb[0].mxu0
        %v649 = vadd.f32 0.0, %v648
        %v650 = vpop.f32.mrb[0].mxu0
        %v651 = vadd.f32 0.0, %v650
        %v652 = vpop.f32.mrb[0].mxu0
        %v653 = vadd.f32 0.0, %v652
        %654 = vmatprep.mubr.bf16.mxu0 0
        %655 = vmatmul.mubr.bf16.gmra.mrb[0].mxu0 %v505
        %v656 = vpop.f32.mrb[0].mxu0
        %v657 = vadd.f32 0.0, %v656
        %v658 = vpop.f32.mrb[0].mxu0
        %v659 = vadd.f32 0.0, %v658
        %v660 = vpop.f32.mrb[0].mxu0
        %v661 = vadd.f32 0.0, %v660
        %v662 = vpop.f32.mrb[0].mxu0
        %v663 = vadd.f32 0.0, %v662
        %664 = vdwg.mxu0
        %v665 = vmax.f32 %v637, 0.0
        %v666 = vmax.f32 %v641, 0.0
        %v667 = vmax.f32 %v647, 0.0
        %v668 = vmax.f32 %v651, 0.0
        %v669 = vmax.f32 %v657, 0.0
        %v670 = vmax.f32 %v661, 0.0
        %v671 = vxor.u32 %v639, 2147483648
        %v672 = vxor.u32 %v643, 2147483648
        %v673 = vxor.u32 %v649, 2147483648
        %v674 = vxor.u32 %v653, 2147483648
        %v675 = vxor.u32 %v659, 2147483648
        %v676 = vxor.u32 %v663, 2147483648
        %v677 = vmul.f32 %v671, 1.442695
        %v678 = vpow.pop %v677
        %v679 = vmul.f32 %v672, 1.442695
        %v680 = vpow.pop %v679
        %v681 = vmul.f32 %v673, 1.442695
        %v682 = vpow.pop %v681
        %v683 = vmul.f32 %v674, 1.442695
        %v684 = vpow.pop %v683
        %v685 = vmul.f32 %v675, 1.442695
        %v686 = vpow.pop %v685
        %v687 = vmul.f32 %v676, 1.442695
        %v688 = vpow.pop %v687
        %v689 = vadd.f32 %v678, 1.0
        %v690 = vadd.f32 %v680, 1.0
        %v691 = vadd.f32 %v682, 1.0
        %v692 = vadd.f32 %v684, 1.0
        %v693 = vadd.f32 %v686, 1.0
        %v694 = vadd.f32 %v688, 1.0
        %v695 = vrcp.pop %v689
        %v696 = vmul.f32 1.0, %v695
        %v697 = vrcp.pop %v690
        %v698 = vmul.f32 1.0, %v697
        %v699 = vrcp.pop %v691
        %v700 = vmul.f32 1.0, %v699
        %v701 = vrcp.pop %v692
        %v702 = vmul.f32 1.0, %v701
        %v703 = vrcp.pop %v693
        %v704 = vmul.f32 1.0, %v703
        %v705 = vrcp.pop %v694
        %v706 = vmul.f32 1.0, %v705
        %v707 = vmul.f32 %v665, %v696
        %v708 = vmul.f32 %v666, %v698
        %v709 = vmul.f32 %v667, %v700
        %v710 = vmul.f32 %v668, %v702
        %v711 = vmul.f32 %v669, %v704
        %v712 = vmul.f32 %v670, %v706
        %v713 = vld [vmem:[%s4] sm:$0x1]
        %v715 = vlaneseq
        %v716 = vshrl.u32 %v715, 7
        %v717 = vsub.s32 0, %v716
        %v718 = vrot.slane %v713, %v717
        %v720 = vmul.f32 %v707, %v718
        %v721 = vmul.f32 %v708, %v718
        %v722 = vmul.f32 %v709, %v718
        %v723 = vmul.f32 %v710, %v718
        %v724 = vmul.f32 %v711, %v718
        %v725 = vmul.f32 %v712, %v718
        %726 = vadd.xlane.f32.xlu0 %v720
        %v727 = vpop.xlane.xlu0 %726
        %728 = vadd.xlane.f32.xlu0 %v721
        %v729 = vpop.xlane.xlu0 %728
        %730 = vadd.xlane.f32.xlu0 %v722
        %v731 = vpop.xlane.xlu0 %730
        %732 = vadd.xlane.f32.xlu0 %v723
        %v733 = vpop.xlane.xlu0 %732
        %734 = vadd.xlane.f32.xlu0 %v724
        %v735 = vpop.xlane.xlu0 %734
        %736 = vadd.xlane.f32.xlu0 %v725
        %v737 = vpop.xlane.xlu0 %736
        %v738 = vsel %vm479, %v727, -1e+30
        %v739 = vsel %vm480, %v729, -1e+30
        %v740 = vsel %vm481, %v731, -1e+30
        %v741 = vsel %vm482, %v733, -1e+30
        %v742 = vsel %vm483, %v735, -1e+30
        %v743 = vsel %vm484, %v737, -1e+30
        %v744 = vld [vmem:[#allocation2] sm:$0x1]
        %v745 = vmax.f32 %v738, %v742
        %v746 = vmax.f32 %v739, %v743
        %v747 = vmax.f32 %v745, %v746
        %v748 = vmax.f32 %v740, %v741
        %v749 = vmax.f32 %v747, %v748
        %v750 = vrot.slane %v749, 4
        %v751 = vmax.f32 %v749, %v750
        %v752 = vrot.slane %v751, 2
        %v753 = vmax.f32 %v751, %v752
        %v754 = vrot.slane %v753, 1
        %v755 = vmax.f32 %v753, %v754
        %v756 = vmax.f32 %v744, %v755
        %v757 = vsub.f32 %v744, %v756
        %v758 = vmul.f32 %v757, 1.442695
        %v759 = vpow.pop %v758
        %v761 = vlaneseq
        %v762 = vshrl.u32 %v761, 7
        %v763 = vsub.s32 0, %v762
        %v764 = vrot.slane %v756, %v763
        %v766 = vsub.f32 %v738, %v764
        %v767 = vsub.f32 %v739, %v764
        %v768 = vsub.f32 %v740, %v764
        %v769 = vsub.f32 %v741, %v764
        %v770 = vsub.f32 %v742, %v764
        %v771 = vsub.f32 %v743, %v764
        %v772 = vmul.f32 %v766, 1.442695
        %v773 = vpow.pop %v772
        %v774 = vmul.f32 %v767, 1.442695
        %v775 = vpow.pop %v774
        %v776 = vmul.f32 %v768, 1.442695
        %v777 = vpow.pop %v776
        %v778 = vmul.f32 %v769, 1.442695
        %v779 = vpow.pop %v778
        %v780 = vmul.f32 %v770, 1.442695
        %v781 = vpow.pop %v780
        %v782 = vmul.f32 %v771, 1.442695
        %v783 = vpow.pop %v782
        %v784 = vld [vmem:[#allocation3] sm:$0x1]
        %v785 = vmul.f32 %v759, %v784
        %vm786 = vcmask 7168
        %v787 = vsel %vm786, %v773, 0.0
        %v788 = vsel %vm786, %v775, 0.0
        %v789 = vadd.f32 %v787, %v788
        %v790 = vsel %vm786, %v777, 0.0
        %v791 = vadd.f32 %v789, %v790
        %v792 = vsel %vm786, %v779, 0.0
        %v793 = vadd.f32 %v791, %v792
        %v794 = vsel %vm786, %v781, 0.0
        %v795 = vadd.f32 %v793, %v794
        %v796 = vsel %vm786, %v783, 0.0
        %v797 = vadd.f32 %v795, %v796
        %v798 = vrot.slane %v797, 4
        %v799 = vadd.f32 %v797, %v798
        %v800 = vrot.slane %v799, 2
        %v801 = vadd.f32 %v799, %v800
        %v802 = vrot.slane %v801, 1
        %v803 = vadd.f32 %v801, %v802
        %v804 = vadd.f32 %v785, %v803
        %vm805 = vcmask 0
        %806 = vst.msk [vmem:[#allocation3] sm:$0x1] %vm805, %v804
        %v807 = vld [vmem:[#allocation4] sm:$0x1]
        %809 = vset.pattern.permute.xlu0 0
        %810 = vperm.xlu0 %809, %v759
        %v811 = vpop.permute.xlu0 %810
        %v813 = vlaneseq
        %v814 = vshrl.u32 %v813, 7
        %v815 = vsub.s32 0, %v814
        %v816 = vrot.slane %v811, %v815
        %v817 = vmul.f32 %v816, %v807
        %819 = vset.pattern.permute.xlu0 0
        %820 = vperm.xlu0 %819, %v773
        %v821 = vpop.permute.xlu0 %820
        %824 = vset.pattern.permute.xlu0 0
        %825 = vperm.xlu0 %824, %v775
        %v826 = vpop.permute.xlu0 %825
        %829 = vset.pattern.permute.xlu0 0
        %830 = vperm.xlu0 %829, %v777
        %v831 = vpop.permute.xlu0 %830
        %834 = vset.pattern.permute.xlu0 0
        %835 = vperm.xlu0 %834, %v779
        %v836 = vpop.permute.xlu0 %835
        %839 = vset.pattern.permute.xlu0 0
        %840 = vperm.xlu0 %839, %v781
        %v841 = vpop.permute.xlu0 %840
        %844 = vset.pattern.permute.xlu0 0
        %845 = vperm.xlu0 %844, %v783
        %v846 = vpop.permute.xlu0 %845
        %v848 = vmul.f32 %v821, %v497
        %v849 = vmul.f32 %v826, %v498
        %v850 = vmul.f32 %v831, %v499
        %v851 = vmul.f32 %v836, %v500
        %v852 = vmul.f32 %v841, %v501
        %v853 = vmul.f32 %v846, %v502
        %v854 = vadd.f32 %v848, %v849
        %v855 = vadd.f32 %v854, %v850
        %v856 = vadd.f32 %v855, %v851
        %v857 = vadd.f32 %v856, %v852
        %v858 = vadd.f32 %v857, %v853
        %v859 = vrot.slane %v858, 4
        %v860 = vadd.f32 %v858, %v859
        %v861 = vrot.slane %v860, 2
        %v862 = vadd.f32 %v860, %v861
        %v863 = vrot.slane %v862, 1
        %v864 = vadd.f32 %v862, %v863
        %v865 = vadd.f32 %v817, %v864
        %866 = vst [vmem:[#allocation4] sm:$0x1] %v865
        %867 = vst.msk [vmem:[#allocation2] sm:$0x1] %vm805, %v756
        // Predicated region
        $region61: #{tpu_custom_call.1} parent=47 // pred_check
          %p868 = pneg %p335
        $region62: #{tpu_custom_call.1} parent=47 // pred_check_branch
          %870 = sbr.rel (%p868) target = $region64
        $region63: #{tpu_custom_call.1} parent=47 // pred_region
          %v871 = vld [vmem:[#allocation4] sm:$0x1]
          %v872 = vld [vmem:[#allocation3] sm:$0x1]
          %874 = vset.pattern.permute.xlu0 0
          %875 = vperm.xlu0 %874, %v872
          %v876 = vpop.permute.xlu0 %875
          %v878 = vlaneseq
          %v879 = vshrl.u32 %v878, 7
          %v880 = vsub.s32 0, %v879
          %v881 = vrot.slane %v876, %v880
          %v882 = vrcp.pop %v881
          %v883 = vmul.f32 %v871, %v882
          %v884 = vld [vmem:[%s5] sm:$0xff]
          %v885 = vld [vmem:[%s5 + $0x8] sm:$0xff]
          %v886 = vld [vmem:[%s5 + $0x10] sm:$0xff]
          %v887 = vld [vmem:[%s5 + $0x18] sm:$0xff]
          %v888 = vld [vmem:[%s5 + $0x20] sm:$0xff]
          %v889 = vld [vmem:[%s5 + $0x28] sm:$0xff]
          %v890 = vld [vmem:[%s5 + $0x30] sm:$0xff]
          %v891 = vld [vmem:[%s5 + $0x38] sm:$0xff]
          %v892 = vld [vmem:[%s5 + $0x40] sm:$0xff]
          %v893 = vld [vmem:[%s5 + $0x48] sm:$0xff]
          %v894 = vld [vmem:[%s5 + $0x50] sm:$0xff]
          %v895 = vld [vmem:[%s5 + $0x58] sm:$0xff]
          %v896 = vld [vmem:[%s5 + $0x60] sm:$0xff]
          %v897 = vld [vmem:[%s5 + $0x68] sm:$0xff]
          %v898 = vld [vmem:[%s5 + $0x70] sm:$0xff]
          %v899 = vld [vmem:[%s5 + $0x78] sm:$0xff]
          %v900 = vld [vmem:[%s6] sm:$0x1]
          %901 = vmatprep.subr.mxu0 0.0
          %902 = vmatpush1.msra.mxu0 %v884
          %903 = vmatprep.subr.mxu0 0.0
          %904 = vmatpush1.msra.mxu0 %v885
          %905 = vmatprep.subr.mxu0 0.0
          %906 = vmatpush1.msra.mxu0 %v886
          %907 = vmatprep.subr.mxu0 0.0
          %908 = vmatpush1.msra.mxu0 %v887
          %909 = vmatprep.subr.mxu0 0.0
          %910 = vmatpush1.msra.mxu0 %v888
          %911 = vmatprep.subr.mxu0 0.0
          %912 = vmatpush1.msra.mxu0 %v889
          %913 = vmatprep.subr.mxu0 0.0
          %914 = vmatpush1.msra.mxu0 %v890
          %915 = vmatprep.subr.mxu0 0.0
          %916 = vmatpush1.msra.mxu0 %v891
          %917 = vmatprep.subr.mxu0 0.0
          %918 = vmatpush1.msra.mxu0 %v892
          %919 = vmatprep.subr.mxu0 0.0
          %920 = vmatpush1.msra.mxu0 %v893
          %921 = vmatprep.subr.mxu0 0.0
          %922 = vmatpush1.msra.mxu0 %v894
          %923 = vmatprep.subr.mxu0 0.0
          %924 = vmatpush1.msra.mxu0 %v895
          %925 = vmatprep.subr.mxu0 0.0
          %926 = vmatpush1.msra.mxu0 %v896
          %927 = vmatprep.subr.mxu0 0.0
          %928 = vmatpush1.msra.mxu0 %v897
          %929 = vmatprep.subr.mxu0 0.0
          %930 = vmatpush1.msra.mxu0 %v898
          %931 = vmatprep.subr.mxu0 0.0
          %932 = vmatpush1.msra.mxu0 %v899
          %933 = vmatprep.subr.mxu0 0.0
          %934 = vmatpush1.msra.mxu0 0.0
          %935 = vmatprep.subr.mxu0 0.0
          %936 = vmatpush1.msra.mxu0 0.0
          %937 = vmatprep.subr.mxu0 0.0
          %938 = vmatpush1.msra.mxu0 0.0
          %939 = vmatprep.subr.mxu0 0.0
          %940 = vmatpush1.msra.mxu0 0.0
          %941 = vmatprep.subr.mxu0 0.0
          %942 = vmatpush1.msra.mxu0 0.0
          %943 = vmatprep.subr.mxu0 0.0
          %944 = vmatpush1.msra.mxu0 0.0
          %945 = vmatprep.subr.mxu0 0.0
          %946 = vmatpush1.msra.mxu0 0.0
          %947 = vmatprep.subr.mxu0 0.0
          %948 = vmatpush1.msra.mxu0 0.0
          %949 = vmatprep.subr.mxu0 0.0
          %950 = vmatpush1.msra.mxu0 0.0
          %951 = vmatprep.subr.mxu0 0.0
          %952 = vmatpush1.msra.mxu0 0.0
          %953 = vmatprep.subr.mxu0 0.0
          %954 = vmatpush1.msra.mxu0 0.0
          %955 = vmatprep.subr.mxu0 0.0
          %956 = vmatpush1.msra.mxu0 0.0
          %957 = vmatprep.subr.mxu0 0.0
          %958 = vmatpush1.msra.mxu0 0.0
          %959 = vmatprep.subr.mxu0 0.0
          %960 = vmatpush1.msra.mxu0 0.0
          %961 = vmatprep.subr.mxu0 0.0
          %962 = vmatpush1.msra.mxu0 0.0
          %963 = vmatprep.subr.mxu0 0.0
          %964 = vmatpush1.msra.mxu0 0.0
          %965 = vmatprep.mubr.f32.mxu0 0.0
          %966 = vmatmul.mubr.f32.gmra.mrb[0].mxu0 %v883
          %v967 = vpop.f32.mrb[0].mxu0
          %v968 = vadd.f32 %v900, %v967
          %v969 = vpop.f32.mrb[0].mxu0
          %970 = vdwg.mxu0
          %vm971 = vcmask 8192
          %972 = vst.msk [vmem:[%s330] sm:$0x1] %vm971, %v968
        $region64: #{tpu_custom_call.1} parent=47 // pred_fallthru
          _
        %s973 = sand.u32 %s199, 1
        %s974 = scalar_lea.sflag [#allocation7], %s973
        %s975 = sand.u32 %s199, 1
        %s976 = scalar_lea.vmem [#allocation10], %s975
        // Predicated region
        $region65: #{tpu_custom_call.1} parent=47 // pred_check
          %p977 = pneg %p209
        $region66: #{tpu_custom_call.1} parent=47 // pred_check_branch
          %979 = sbr.rel (%p977) target = $region68
        $region67: #{tpu_custom_call.1} parent=47 // pred_region
          %s981 = ssub.s32 16, 16
          %982 = vsyncadd %s974, %s981
          %s983 = smul.addr %s29, 16
          %s984 = scalar_lea.hbm %s7, %s983
          %s986 = sshll.u32 %s976, 4
          %s987 = int_to_ptr.vmem [resolvable:$true] %s986
          %989 = dma.vmem_to_hbm [thread:$0]  %s987, 16, %s984, %s974
        $region68: #{tpu_custom_call.1} parent=47 // pred_fallthru
          _
      $region48: #{tpu_custom_call.1} parent=5 // pred_fallthru
        _
      %p990 = scmp.le.s32.totalorder 2, %s20
      // Predicated region
      $region69: #{tpu_custom_call.1} parent=5 // pred_check
        %p991 = pneg %p990
      $region70: #{tpu_custom_call.1} parent=5 // pred_check_branch
        %993 = sbr.rel (%p991) target = $region72
      $region71: #{tpu_custom_call.1} parent=5 // pred_region
        %s994 = ssub.s32 %s20, 2
        // Predicated region
        $region73: #{tpu_custom_call.1} parent=71 // pred_check
          %p995 = pneg %p215
        $region74: #{tpu_custom_call.1} parent=71 // pred_check_branch
          %997 = sbr.rel (%p995) target = $region76
        $region75: #{tpu_custom_call.1} parent=71 // pred_region
          %s998 = sand.u32 %s200, 1
          %s999 = scalar_lea.sflag [#allocation7], %s998
          %s1000 = sand.u32 %s200, 1
          %s1001 = scalar_lea.vmem [#allocation10], %s1000
          %1002 = dma.done %s999, 16
        $region76: #{tpu_custom_call.1} parent=71 // pred_fallthru
          _
      $region72: #{tpu_custom_call.1} parent=5 // pred_fallthru
        _
    $region6: #{tpu_custom_call.1} parent=1 // loop_footer
      %s24 = sadd.s32 1, %s20
    $region7: #{tpu_custom_call.1} parent=1 // loop_footer_branch
      %19 = sbr.rel target = $region3
    $region8: #{tpu_custom_call.1} parent=1 // loop_exit
      _
    %1003 = vsyncpa [#allocation6], 1
    %s1004 = scalar_lea.sflag [#allocation6], 1
    %1005 = vsyncpa %s1004, 1
    %1006 = vsyncpa [#allocation9], 1
    %1007 = vsyncpa [#allocation7], 1
    %s1008 = scalar_lea.sflag [#allocation7], 1
    %1009 = vsyncpa %s1008, 1

</llo_original>
